<compile_context>
chip_gen: v5e
topology: v5e:2x2
jax: 0.10.0
libtpu: 0.0.40
codegen_flags: <defaults>
</compile_context>

<pallas_src>
import jax
import jax.numpy as jnp
from jax import lax
from jax.experimental import pallas as pl
from jax.experimental.pallas import tpu as pltpu


def _round_up(n, m):
    return ((n + m - 1) // m) * m


def _largest_divisor_leq(n, cap):
    best = 1
    for d in range(1, min(n, cap) + 1):
        if n % d == 0:
            best = d
    return best


def _padded_bytes(shape, dtype):
    """Approximate VMEM footprint after (sublane, lane) tile padding."""
    itemsize = jnp.dtype(dtype).itemsize
    dims = list(shape)
    dims[-1] = _round_up(dims[-1], 128)
    if len(dims) >= 2:
        dims[-2] = _round_up(dims[-2], 8 * (4 // itemsize))
    total = itemsize
    for d in dims:
        total *= d
    return total


# ----------------------------------------------------------------------------
# Fused kernel: n_layer LSTM layers + classifier head, chunked over time.
# ----------------------------------------------------------------------------
def _make_fused_rnn_kernel(n_layer, t_chunk, batch_block, h_stride,
                           n_time_chunks, compute_dtype):
    """Builds the kernel body. All sizes are trace-time constants."""
    Tc, Bb, Hp = t_chunk, batch_block, h_stride

    def kernel(*refs):
        # ---- unpack: inputs, output, scratch ---------------------------------
        x_ref = refs[0]                                   # (Tc*Bb, D)   bf16
        w_ih_refs = refs[1:1 + n_layer]                   # (K_in, G)    bf16
        w_hh_refs = refs[1 + n_layer:1 + 2 * n_layer]     # (Hp, G)      bf16
        b_refs = refs[1 + 2 * n_layer:1 + 3 * n_layer]    # (1, G)       f32
        w_cls_ref = refs[1 + 3 * n_layer]                 # (Hp, Cp)     bf16
        b_cls_ref = refs[2 + 3 * n_layer]                 # (1, Cp)      f32
        out_ref = refs[3 + 3 * n_layer]                   # (Bb, Cp)     f32
        h_state = refs[4 + 3 * n_layer]                   # (n_layer,Bb,Hp) f32 persistent
        c_state = refs[5 + 3 * n_layer]                   # (n_layer,Bb,Hp) f32 persistent
        y_sc = refs[6 + 3 * n_layer]                      # (Tc*Bb, Hp)  bf16 scratch
        gx_sc = refs[7 + 3 * n_layer]                     # (Tc*Bb, G)   bf16 scratch

        t_blk = pl.program_id(1)

        # ---- zero the recurrent state at the start of each sequence ----------
        @pl.when(t_blk == 0)
        def _():
            h_state[...] = jnp.zeros_like(h_state)
            c_state[...] = jnp.zeros_like(c_state)

        for layer in range(n_layer):
            # ---- hoisted input projection: one big matmul over the chunk -----
            inp = x_ref[...] if layer == 0 else y_sc[...]           # bf16 already
            gx_sc[...] = (
                jnp.dot(inp, w_ih_refs[layer][...],
                        preferred_element_type=jnp.float32)
                + b_refs[layer][...]                                # bias folded in
            ).astype(compute_dtype)                                 # bf16 scratch

            h0 = h_state[layer]                                     # (Bb, Hp) f32
            c0 = c_state[layer]
            is_last_layer = layer == n_layer - 1

            def step(t, carry, _layer=layer, _is_last=is_last_layer):
                h_prev, c_prev = carry
                row = pl.multiple_of(t * Bb, 8)                     # tile-aligned rows
                # W_hh read from the ref inside the loop (cheap VMEM load) so it
                # is not pinned in vregs across the unrolled iterations.
                gates = gx_sc[pl.ds(row, Bb), :].astype(jnp.float32) + jnp.dot(
                    h_prev.astype(compute_dtype), w_hh_refs[_layer][...],
                    preferred_element_type=jnp.float32)
                i_g = jax.nn.sigmoid(gates[:, 0 * Hp:1 * Hp])
                f_g = jax.nn.sigmoid(gates[:, 1 * Hp:2 * Hp])
                g_g = jnp.tanh(gates[:, 2 * Hp:3 * Hp])
                o_g = jax.nn.sigmoid(gates[:, 3 * Hp:4 * Hp])
                c_new = f_g * c_prev + i_g * g_g
                h_new = o_g * jnp.tanh(c_new)
                if not _is_last:                                    # next layer's input
                    y_sc[pl.ds(row, Bb), :] = h_new.astype(compute_dtype)
                return (h_new, c_new)

            h_f, c_f = lax.fori_loop(0, Tc, step, (h0, c0),
                                     unroll=min(Tc, 8))             # bounded unroll
            h_state[layer] = h_f
            c_state[layer] = c_f

        # ---- classifier head on h_n[-1], only at the final time chunk --------
        @pl.when(t_blk == n_time_chunks - 1)
        def _():
            logits = jnp.dot(h_state[n_layer - 1].astype(compute_dtype),
                             w_cls_ref[...],
                             preferred_element_type=jnp.float32) + b_cls_ref[...]
            out_ref[...] = logits.astype(out_ref.dtype)

    return kernel


# ----------------------------------------------------------------------------
# Wrapper
# ----------------------------------------------------------------------------
def rnn_forward(x, params, *, t_chunk=None, compute_dtype=jnp.bfloat16):
    """x: (B, T, in_dim) batch-first, like the PyTorch module. Returns (B, C)."""
    B, T, D = x.shape
    lstm_params = params["lstm"]
    n_layer = len(lstm_params)
    H = lstm_params[0][1].shape[1]        # w_hh: (4H, H)
    C = params["cls_w"].shape[0]

    # ---- layout parameters ---------------------------------------------------
    # Per-gate lane stride: a full 128-lane block per gate when H is large,
    # contiguous packing when all four gates fit in one vreg (4*H <= 128).
    Hp = H if 4 * H <= 128 else _round_up(H, 128)
    G = _round_up(4 * Hp, 128)            # gate (gx) lane width
    Cp = _round_up(C, 128)                # lane-dense classifier output

    B_pad = _round_up(B, 8)
    # Small batches: one block (better MXU M fill). Larger: 8-row blocks so the
    # leading "parallel" grid axis can shard across TensorCores (v7x).
    Bb = B_pad if B_pad <= 32 else 8
    n_bb = B_pad // Bb

    if t_chunk is None:
        t_chunk = _largest_divisor_leq(T, 32)
    if T % t_chunk != 0:
        # TODO(synk): support non-dividing chunk sizes by masking tail steps.
        t_chunk = _largest_divisor_leq(T, t_chunk)
    Tc = t_chunk
    n_tc = T // Tc

    # ---- pack weights (PyTorch (4H, d_in), gate order i,f,g,o) ---------------
    def pack_w(w_t, rows):
        out = jnp.zeros((rows, G), jnp.float32)
        for g in range(4):
            out = out.at[:w_t.shape[1], g * Hp:g * Hp + H].set(
                jnp.transpose(w_t[g * H:(g + 1) * H, :]))
        return out.astype(compute_dtype)

    def pack_b(b):
        out = jnp.zeros((1, G), jnp.float32)
        for g in range(4):
            out = out.at[0, g * Hp:g * Hp + H].set(b[g * H:(g + 1) * H])
        return out

    w_ih_list, w_hh_list, b_list = [], [], []
    for layer, (w_ih, w_hh, b_ih, b_hh) in enumerate(lstm_params):
        rows_in = D if layer == 0 else Hp
        w_ih_list.append(pack_w(w_ih, rows_in))
        w_hh_list.append(pack_w(w_hh, Hp))
        b_list.append(pack_b(b_ih + b_hh))            # fold the two biases

    w_cls = jnp.zeros((Hp, Cp), jnp.float32)
    w_cls = w_cls.at[:H, :C].set(jnp.transpose(params["cls_w"])).astype(compute_dtype)
    b_cls = jnp.zeros((1, Cp), jnp.float32).at[0, :C].set(params["cls_b"])

    # ---- x: time-major, batch padded, rows ordered (batch_block, t, in-block) -
    x_tm = jnp.transpose(x, (1, 0, 2)).astype(jnp.float32)          # (T, B, D)
    x_tm = jnp.pad(x_tm, ((0, 0), (0, B_pad - B), (0, 0)))          # (T, B_pad, D)
    x_tm = x_tm.reshape(T, n_bb, Bb, D).transpose(1, 0, 2, 3)
    x_tm = x_tm.reshape(n_bb * T * Bb, D).astype(compute_dtype)

    # ---- specs ----------------------------------------------------------------
    const2 = lambda b, t: (0, 0)
    in_specs = [pl.BlockSpec((Tc * Bb, D), lambda b, t: (b * n_tc + t, 0))]
    in_specs += [pl.BlockSpec(w.shape, const2) for w in w_ih_list]
    in_specs += [pl.BlockSpec(w.shape, const2) for w in w_hh_list]
    in_specs += [pl.BlockSpec(b.shape, const2) for b in b_list]
    in_specs += [pl.BlockSpec(w_cls.shape, const2), pl.BlockSpec(b_cls.shape, const2)]
    out_spec = pl.BlockSpec((Bb, Cp), lambda b, t: (b, 0))

    scratch_shapes = [
        pltpu.VMEM((n_layer, Bb, Hp), jnp.float32),   # h carry (persists across chunks)
        pltpu.VMEM((n_layer, Bb, Hp), jnp.float32),   # c carry
        pltpu.VMEM((Tc * Bb, Hp), compute_dtype),     # inter-layer activations (bf16)
        pltpu.VMEM((Tc * Bb, G), compute_dtype),      # hoisted x-projection   (bf16)
    ]

    # ---- explicit scoped-VMEM limit from actual buffer sizes ------------------
    vmem_need = 2 * _padded_bytes((Tc * Bb, D), compute_dtype)       # x (double buf)
    for w in w_ih_list + w_hh_list + [w_cls]:
        vmem_need += 2 * _padded_bytes(w.shape, compute_dtype)
    for b in b_list + [b_cls]:
        vmem_need += 2 * _padded_bytes(b.shape, jnp.float32)
    vmem_need += 2 * _padded_bytes((Bb, Cp), jnp.float32)            # out block
    vmem_need += 2 * _padded_bytes((n_layer, Bb, Hp), jnp.float32)   # h + c carry
    vmem_need += _padded_bytes((Tc * Bb, Hp), compute_dtype)
    vmem_need += _padded_bytes((Tc * Bb, G), compute_dtype)
    vmem_limit = int(min(128 << 20, max(32 << 20, 2 * vmem_need)))

    kernel = _make_fused_rnn_kernel(n_layer, Tc, Bb, Hp, n_tc, compute_dtype)

    logits_pad = pl.pallas_call(
        kernel,
        out_shape=jax.ShapeDtypeStruct((B_pad, Cp), jnp.float32),
        grid=(n_bb, n_tc),
        in_specs=in_specs,
        out_specs=out_spec,
        scratch_shapes=scratch_shapes,
        compiler_params=pltpu.CompilerParams(
            dimension_semantics=("parallel", "arbitrary"),
            vmem_limit_bytes=vmem_limit),
    )(x_tm, *w_ih_list, *w_hh_list, *b_list, w_cls, b_cls)
    return logits_pad[:B, :C]


# ----------------------------------------------------------------------------
# Parameter init (PyTorch layout / U(-1/sqrt(H), 1/sqrt(H))) and f32 reference
# ----------------------------------------------------------------------------
def init_params(key, in_dim, hidden_dim, n_layer, n_classes):
    bound = 1.0 / (hidden_dim ** 0.5)
    lstm_params = []
    for layer in range(n_layer):
        d_in = in_dim if layer == 0 else hidden_dim
        key, k1, k2, k3, k4 = jax.random.split(key, 5)
        w_ih = jax.random.uniform(k1, (4 * hidden_dim, d_in), jnp.float32, -bound, bound)
        w_hh = jax.random.uniform(k2, (4 * hidden_dim, hidden_dim), jnp.float32, -bound, bound)
        b_ih = jax.random.uniform(k3, (4 * hidden_dim,), jnp.float32, -bound, bound)
        b_hh = jax.random.uniform(k4, (4 * hidden_dim,), jnp.float32, -bound, bound)
        lstm_params.append((w_ih, w_hh, b_ih, b_hh))
    key, k5, k6 = jax.random.split(key, 3)
    cls_w = jax.random.uniform(k5, (n_classes, hidden_dim), jnp.float32, -bound, bound)
    cls_b = jax.random.uniform(k6, (n_classes,), jnp.float32, -bound, bound)
    return {"lstm": lstm_params, "cls_w": cls_w, "cls_b": cls_b}


def rnn_reference(x, params):
    """Pure-JAX f32 reference matching the PyTorch module semantics."""
    x = x.astype(jnp.float32)
    B, T, _ = x.shape
    seq = x
    h = None
    for (w_ih, w_hh, b_ih, b_hh) in params["lstm"]:
        H = w_hh.shape[1]
        h = jnp.zeros((B, H), jnp.float32)
        c = jnp.zeros((B, H), jnp.float32)
        outs = []
        for t in range(T):
            g = seq[:, t, :] @ w_ih.T + h @ w_hh.T + b_ih + b_hh
            i_g = jax.nn.sigmoid(g[:, 0 * H:1 * H])
            f_g = jax.nn.sigmoid(g[:, 1 * H:2 * H])
            g_g = jnp.tanh(g[:, 2 * H:3 * H])
            o_g = jax.nn.sigmoid(g[:, 3 * H:4 * H])
            c = f_g * c + i_g * g_g
            h = o_g * jnp.tanh(c)
            outs.append(h)
        seq = jnp.stack(outs, axis=1)
    return h @ params["cls_w"].T + params["cls_b"]


if __name__ == "__main__":
    # small shapes consistent with the module: (batch, seq, in_dim)
    B, T, IN_DIM, HIDDEN, N_LAYER, N_CLASSES = 2, 8, 16, 32, 2, 10

    key = jax.random.PRNGKey(0)
    key, k_x = jax.random.split(key)
    x = jax.random.normal(k_x, (B, T, IN_DIM), dtype=jnp.float32)
    params = init_params(key, IN_DIM, HIDDEN, N_LAYER, N_CLASSES)

    # t_chunk=4 exercises the time-chunked grid (2 chunks) + h/c carry logic.
    fwd = jax.jit(lambda xx, pp: rnn_forward(xx, pp, t_chunk=4))
    logits = jax.block_until_ready(fwd(x, params))

    assert logits.shape == (B, N_CLASSES)
    assert bool(jnp.all(jnp.isfinite(logits)))

    # correctness vs f32 reference (kernel matmuls/scratch run in bf16 -> loose tol)
    ref = rnn_reference(x, params)
    max_err = float(jnp.max(jnp.abs(logits - ref)))
    assert max_err < 1e-1, f"max abs error vs reference: {max_err}"

    print("KERNEL_OK")
</pallas_src>

<mosaic_0001>
module attributes {stable_mosaic.version = 11 : i64} {
  func.func @kernel(%arg0: i32, %arg1: i32, %arg2: memref<32x16xbf16, #tpu.memory_space<vmem>>, %arg3: memref<16x128xbf16, #tpu.memory_space<vmem>>, %arg4: memref<32x128xbf16, #tpu.memory_space<vmem>>, %arg5: memref<32x128xbf16, #tpu.memory_space<vmem>>, %arg6: memref<32x128xbf16, #tpu.memory_space<vmem>>, %arg7: memref<1x128xf32, #tpu.memory_space<vmem>>, %arg8: memref<1x128xf32, #tpu.memory_space<vmem>>, %arg9: memref<32x128xbf16, #tpu.memory_space<vmem>>, %arg10: memref<1x128xf32, #tpu.memory_space<vmem>>, %arg11: memref<8x128xf32, #tpu.memory_space<vmem>>, %arg12: memref<2x8x32xf32, #tpu.memory_space<vmem>>, %arg13: memref<2x8x32xf32, #tpu.memory_space<vmem>>, %arg14: memref<32x32xbf16, #tpu.memory_space<vmem>>, %arg15: memref<32x128xbf16, #tpu.memory_space<vmem>>) attributes {dimension_semantics = [#tpu.dimension_semantics<parallel>, #tpu.dimension_semantics<arbitrary>], iteration_bounds = array<i64: 1, 2>, scalar_prefetch = 0 : i64, scratch_operands = 4 : i64, tpu.core_type = #tpu.core_type<tc>, window_params = [{transform_indices = @transform_0, window_bounds = array<i64: 32, 16>}, {pipeline_mode = #tpu.pipeline_mode<synchronous>, transform_indices = @transform_1, window_bounds = array<i64: 16, 128>}, {pipeline_mode = #tpu.pipeline_mode<synchronous>, transform_indices = @transform_2, window_bounds = array<i64: 32, 128>}, {pipeline_mode = #tpu.pipeline_mode<synchronous>, transform_indices = @transform_3, window_bounds = array<i64: 32, 128>}, {pipeline_mode = #tpu.pipeline_mode<synchronous>, transform_indices = @transform_4, window_bounds = array<i64: 32, 128>}, {pipeline_mode = #tpu.pipeline_mode<synchronous>, transform_indices = @transform_5, window_bounds = array<i64: 1, 128>}, {pipeline_mode = #tpu.pipeline_mode<synchronous>, transform_indices = @transform_6, window_bounds = array<i64: 1, 128>}, {pipeline_mode = #tpu.pipeline_mode<synchronous>, transform_indices = @transform_7, window_bounds = array<i64: 32, 128>}, {pipeline_mode = #tpu.pipeline_mode<synchronous>, transform_indices = @transform_8, window_bounds = array<i64: 1, 128>}, {transform_indices = @transform_9, window_bounds = array<i64: 8, 128>}]} {
    %c0_i32 = arith.constant 0 : i32
    %0 = arith.cmpi eq, %arg1, %c0_i32 : i32
    %1 = arith.extui %0 : i1 to i32
    %c0_i32_0 = arith.constant 0 : i32
    %2 = arith.cmpi ne, %1, %c0_i32_0 : i32
    scf.if %2 {
      %cst_115 = arith.constant 0.000000e+00 : f32
      %326 = vector.broadcast %cst_115 : f32 to vector<2x8x32xf32>
      %c0_116 = arith.constant 0 : index
      %c0_117 = arith.constant 0 : index
      %c0_118 = arith.constant 0 : index
      %327 = vector.load %arg12[%c0_116, %c0_117, %c0_118] : memref<2x8x32xf32, #tpu.memory_space<vmem>>, vector<2x8x32xf32>
      tpu.vector_store %arg12[%c0_116, %c0_117, %c0_118], %326 {strides = array<i32>} : memref<2x8x32xf32, #tpu.memory_space<vmem>>, vector<2x8x32xf32>,
      %cst_119 = arith.constant 0.000000e+00 : f32
      %328 = vector.broadcast %cst_119 : f32 to vector<2x8x32xf32>
      %c0_120 = arith.constant 0 : index
      %c0_121 = arith.constant 0 : index
      %c0_122 = arith.constant 0 : index
      %329 = vector.load %arg13[%c0_120, %c0_121, %c0_122] : memref<2x8x32xf32, #tpu.memory_space<vmem>>, vector<2x8x32xf32>
      tpu.vector_store %arg13[%c0_120, %c0_121, %c0_122], %328 {strides = array<i32>} : memref<2x8x32xf32, #tpu.memory_space<vmem>>, vector<2x8x32xf32>,
    } else {
    }
    %c0 = arith.constant 0 : index
    %c0_1 = arith.constant 0 : index
    %3 = vector.load %arg2[%c0, %c0_1] : memref<32x16xbf16, #tpu.memory_space<vmem>>, vector<32x16xbf16>
    %c0_2 = arith.constant 0 : index
    %c0_3 = arith.constant 0 : index
    %4 = vector.load %arg3[%c0_2, %c0_3] : memref<16x128xbf16, #tpu.memory_space<vmem>>, vector<16x128xbf16>
    %cst = arith.constant dense<0.000000e+00> : vector<32x128xf32>
    %5 = tpu.matmul %3, %4, %cst {dimension_numbers = #tpu.dot_dimension_numbers<[1], [0], [0], [1], [0, 0, 1, 1], [], []>} : vector<32x16xbf16>, vector<16x128xbf16>, vector<32x128xf32> -> vector<32x128xf32>
    %c0_4 = arith.constant 0 : index
    %c0_5 = arith.constant 0 : index
    %6 = vector.load %arg7[%c0_4, %c0_5] : memref<1x128xf32, #tpu.memory_space<vmem>>, vector<1x128xf32>
    %7 = vector.broadcast %6 : vector<1x128xf32> to vector<32x128xf32>
    %8 = arith.addf %5, %7 : vector<32x128xf32>
    %9 = arith.truncf %8 : vector<32x128xf32> to vector<32x128xbf16>
    %c0_6 = arith.constant 0 : index
    %c0_7 = arith.constant 0 : index
    %10 = vector.load %arg15[%c0_6, %c0_7] : memref<32x128xbf16, #tpu.memory_space<vmem>>, vector<32x128xbf16>
    tpu.vector_store %arg15[%c0_6, %c0_7], %9 {strides = array<i32>} : memref<32x128xbf16, #tpu.memory_space<vmem>>, vector<32x128xbf16>,
    %c0_8 = arith.constant 0 : index
    %c0_9 = arith.constant 0 : index
    %c0_10 = arith.constant 0 : index
    %11 = vector.load %arg12[%c0_8, %c0_9, %c0_10] : memref<2x8x32xf32, #tpu.memory_space<vmem>>, vector<1x8x32xf32>
    %12 = vector.shape_cast %11 : vector<1x8x32xf32> to vector<8x32xf32>
    %c0_11 = arith.constant 0 : index
    %c0_12 = arith.constant 0 : index
    %c0_13 = arith.constant 0 : index
    %13 = vector.load %arg13[%c0_11, %c0_12, %c0_13] : memref<2x8x32xf32, #tpu.memory_space<vmem>>, vector<1x8x32xf32>
    %14 = vector.shape_cast %13 : vector<1x8x32xf32> to vector<8x32xf32>
    %c0_i32_14 = arith.constant 0 : i32
    %c8_i32 = arith.constant 8 : i32
    %15 = arith.muli %c0_i32_14, %c8_i32 : i32
    %16 = tpu.assume_multiple %15, 8 : i32
    %17 = arith.index_cast %16 : i32 to index
    %c0_15 = arith.constant 0 : index
    %18 = vector.load %arg15[%17, %c0_15] : memref<32x128xbf16, #tpu.memory_space<vmem>>, vector<8x128xbf16>
    %19 = arith.extf %18 : vector<8x128xbf16> to vector<8x128xf32>
    %20 = arith.truncf %12 : vector<8x32xf32> to vector<8x32xbf16>
    %c0_16 = arith.constant 0 : index
    %c0_17 = arith.constant 0 : index
    %21 = vector.load %arg5[%c0_16, %c0_17] : memref<32x128xbf16, #tpu.memory_space<vmem>>, vector<32x128xbf16>
    %cst_18 = arith.constant dense<0.000000e+00> : vector<8x128xf32>
    %22 = tpu.matmul %20, %21, %cst_18 {dimension_numbers = #tpu.dot_dimension_numbers<[1], [0], [0], [1], [0, 0, 1, 1], [], []>} : vector<8x32xbf16>, vector<32x128xbf16>, vector<8x128xf32> -> vector<8x128xf32>
    %23 = arith.addf %19, %22 : vector<8x128xf32>
    %24 = vector.extract_strided_slice %23 {offsets = [0, 0], sizes = [8, 32], strides = [1, 1]} : vector<8x128xf32> to vector<8x32xf32>
    %25 = arith.negf %24 : vector<8x32xf32>
    %26 = math.exp %25 : vector<8x32xf32>
    %cst_19 = arith.constant 1.000000e+00 : f32
    %27 = vector.broadcast %cst_19 : f32 to vector<8x32xf32>
    %28 = arith.addf %27, %26 : vector<8x32xf32>
    %29 = arith.divf %27, %28 : vector<8x32xf32>
    %30 = vector.extract_strided_slice %23 {offsets = [0, 32], sizes = [8, 32], strides = [1, 1]} : vector<8x128xf32> to vector<8x32xf32>
    %31 = arith.negf %30 : vector<8x32xf32>
    %32 = math.exp %31 : vector<8x32xf32>
    %cst_20 = arith.constant 1.000000e+00 : f32
    %33 = vector.broadcast %cst_20 : f32 to vector<8x32xf32>
    %34 = arith.addf %33, %32 : vector<8x32xf32>
    %35 = arith.divf %33, %34 : vector<8x32xf32>
    %36 = vector.extract_strided_slice %23 {offsets = [0, 64], sizes = [8, 32], strides = [1, 1]} : vector<8x128xf32> to vector<8x32xf32>
    %37 = math.tanh %36 : vector<8x32xf32>
    %38 = vector.extract_strided_slice %23 {offsets = [0, 96], sizes = [8, 32], strides = [1, 1]} : vector<8x128xf32> to vector<8x32xf32>
    %39 = arith.negf %38 : vector<8x32xf32>
    %40 = math.exp %39 : vector<8x32xf32>
    %cst_21 = arith.constant 1.000000e+00 : f32
    %41 = vector.broadcast %cst_21 : f32 to vector<8x32xf32>
    %42 = arith.addf %41, %40 : vector<8x32xf32>
    %43 = arith.divf %41, %42 : vector<8x32xf32>
    %44 = arith.mulf %35, %14 : vector<8x32xf32>
    %45 = arith.mulf %29, %37 : vector<8x32xf32>
    %46 = arith.addf %44, %45 : vector<8x32xf32>
    %47 = math.tanh %46 : vector<8x32xf32>
    %48 = arith.mulf %43, %47 : vector<8x32xf32>
    %49 = arith.truncf %48 : vector<8x32xf32> to vector<8x32xbf16>
    %50 = arith.index_cast %16 : i32 to index
    %c0_22 = arith.constant 0 : index
    %51 = vector.load %arg14[%50, %c0_22] : memref<32x32xbf16, #tpu.memory_space<vmem>>, vector<8x32xbf16>
    tpu.vector_store %arg14[%50, %c0_22], %49 {strides = array<i32>} : memref<32x32xbf16, #tpu.memory_space<vmem>>, vector<8x32xbf16>,
    %c1_i32 = arith.constant 1 : i32
    %c8_i32_23 = arith.constant 8 : i32
    %52 = arith.muli %c1_i32, %c8_i32_23 : i32
    %53 = tpu.assume_multiple %52, 8 : i32
    %54 = arith.index_cast %53 : i32 to index
    %c0_24 = arith.constant 0 : index
    %55 = vector.load %arg15[%54, %c0_24] : memref<32x128xbf16, #tpu.memory_space<vmem>>, vector<8x128xbf16>
    %56 = arith.extf %55 : vector<8x128xbf16> to vector<8x128xf32>
    %57 = arith.truncf %48 : vector<8x32xf32> to vector<8x32xbf16>
    %c0_25 = arith.constant 0 : index
    %c0_26 = arith.constant 0 : index
    %58 = vector.load %arg5[%c0_25, %c0_26] : memref<32x128xbf16, #tpu.memory_space<vmem>>, vector<32x128xbf16>
    %cst_27 = arith.constant dense<0.000000e+00> : vector<8x128xf32>
    %59 = tpu.matmul %57, %58, %cst_27 {dimension_numbers = #tpu.dot_dimension_numbers<[1], [0], [0], [1], [0, 0, 1, 1], [], []>} : vector<8x32xbf16>, vector<32x128xbf16>, vector<8x128xf32> -> vector<8x128xf32>
    %60 = arith.addf %56, %59 : vector<8x128xf32>
    %61 = vector.extract_strided_slice %60 {offsets = [0, 0], sizes = [8, 32], strides = [1, 1]} : vector<8x128xf32> to vector<8x32xf32>
    %62 = arith.negf %61 : vector<8x32xf32>
    %63 = math.exp %62 : vector<8x32xf32>
    %cst_28 = arith.constant 1.000000e+00 : f32
    %64 = vector.broadcast %cst_28 : f32 to vector<8x32xf32>
    %65 = arith.addf %64, %63 : vector<8x32xf32>
    %66 = arith.divf %64, %65 : vector<8x32xf32>
    %67 = vector.extract_strided_slice %60 {offsets = [0, 32], sizes = [8, 32], strides = [1, 1]} : vector<8x128xf32> to vector<8x32xf32>
    %68 = arith.negf %67 : vector<8x32xf32>
    %69 = math.exp %68 : vector<8x32xf32>
    %cst_29 = arith.constant 1.000000e+00 : f32
    %70 = vector.broadcast %cst_29 : f32 to vector<8x32xf32>
    %71 = arith.addf %70, %69 : vector<8x32xf32>
    %72 = arith.divf %70, %71 : vector<8x32xf32>
    %73 = vector.extract_strided_slice %60 {offsets = [0, 64], sizes = [8, 32], strides = [1, 1]} : vector<8x128xf32> to vector<8x32xf32>
    %74 = math.tanh %73 : vector<8x32xf32>
    %75 = vector.extract_strided_slice %60 {offsets = [0, 96], sizes = [8, 32], strides = [1, 1]} : vector<8x128xf32> to vector<8x32xf32>
    %76 = arith.negf %75 : vector<8x32xf32>
    %77 = math.exp %76 : vector<8x32xf32>
    %cst_30 = arith.constant 1.000000e+00 : f32
    %78 = vector.broadcast %cst_30 : f32 to vector<8x32xf32>
    %79 = arith.addf %78, %77 : vector<8x32xf32>
    %80 = arith.divf %78, %79 : vector<8x32xf32>
    %81 = arith.mulf %72, %46 : vector<8x32xf32>
    %82 = arith.mulf %66, %74 : vector<8x32xf32>
    %83 = arith.addf %81, %82 : vector<8x32xf32>
    %84 = math.tanh %83 : vector<8x32xf32>
    %85 = arith.mulf %80, %84 : vector<8x32xf32>
    %86 = arith.truncf %85 : vector<8x32xf32> to vector<8x32xbf16>
    %87 = arith.index_cast %53 : i32 to index
    %c0_31 = arith.constant 0 : index
    %88 = vector.load %arg14[%87, %c0_31] : memref<32x32xbf16, #tpu.memory_space<vmem>>, vector<8x32xbf16>
    tpu.vector_store %arg14[%87, %c0_31], %86 {strides = array<i32>} : memref<32x32xbf16, #tpu.memory_space<vmem>>, vector<8x32xbf16>,
    %c2_i32 = arith.constant 2 : i32
    %c8_i32_32 = arith.constant 8 : i32
    %89 = arith.muli %c2_i32, %c8_i32_32 : i32
    %90 = tpu.assume_multiple %89, 8 : i32
    %91 = arith.index_cast %90 : i32 to index
    %c0_33 = arith.constant 0 : index
    %92 = vector.load %arg15[%91, %c0_33] : memref<32x128xbf16, #tpu.memory_space<vmem>>, vector<8x128xbf16>
    %93 = arith.extf %92 : vector<8x128xbf16> to vector<8x128xf32>
    %94 = arith.truncf %85 : vector<8x32xf32> to vector<8x32xbf16>
    %c0_34 = arith.constant 0 : index
    %c0_35 = arith.constant 0 : index
    %95 = vector.load %arg5[%c0_34, %c0_35] : memref<32x128xbf16, #tpu.memory_space<vmem>>, vector<32x128xbf16>
    %cst_36 = arith.constant dense<0.000000e+00> : vector<8x128xf32>
    %96 = tpu.matmul %94, %95, %cst_36 {dimension_numbers = #tpu.dot_dimension_numbers<[1], [0], [0], [1], [0, 0, 1, 1], [], []>} : vector<8x32xbf16>, vector<32x128xbf16>, vector<8x128xf32> -> vector<8x128xf32>
    %97 = arith.addf %93, %96 : vector<8x128xf32>
    %98 = vector.extract_strided_slice %97 {offsets = [0, 0], sizes = [8, 32], strides = [1, 1]} : vector<8x128xf32> to vector<8x32xf32>
    %99 = arith.negf %98 : vector<8x32xf32>
    %100 = math.exp %99 : vector<8x32xf32>
    %cst_37 = arith.constant 1.000000e+00 : f32
    %101 = vector.broadcast %cst_37 : f32 to vector<8x32xf32>
    %102 = arith.addf %101, %100 : vector<8x32xf32>
    %103 = arith.divf %101, %102 : vector<8x32xf32>
    %104 = vector.extract_strided_slice %97 {offsets = [0, 32], sizes = [8, 32], strides = [1, 1]} : vector<8x128xf32> to vector<8x32xf32>
    %105 = arith.negf %104 : vector<8x32xf32>
    %106 = math.exp %105 : vector<8x32xf32>
    %cst_38 = arith.constant 1.000000e+00 : f32
    %107 = vector.broadcast %cst_38 : f32 to vector<8x32xf32>
    %108 = arith.addf %107, %106 : vector<8x32xf32>
    %109 = arith.divf %107, %108 : vector<8x32xf32>
    %110 = vector.extract_strided_slice %97 {offsets = [0, 64], sizes = [8, 32], strides = [1, 1]} : vector<8x128xf32> to vector<8x32xf32>
    %111 = math.tanh %110 : vector<8x32xf32>
    %112 = vector.extract_strided_slice %97 {offsets = [0, 96], sizes = [8, 32], strides = [1, 1]} : vector<8x128xf32> to vector<8x32xf32>
    %113 = arith.negf %112 : vector<8x32xf32>
    %114 = math.exp %113 : vector<8x32xf32>
    %cst_39 = arith.constant 1.000000e+00 : f32
    %115 = vector.broadcast %cst_39 : f32 to vector<8x32xf32>
    %116 = arith.addf %115, %114 : vector<8x32xf32>
    %117 = arith.divf %115, %116 : vector<8x32xf32>
    %118 = arith.mulf %109, %83 : vector<8x32xf32>
    %119 = arith.mulf %103, %111 : vector<8x32xf32>
    %120 = arith.addf %118, %119 : vector<8x32xf32>
    %121 = math.tanh %120 : vector<8x32xf32>
    %122 = arith.mulf %117, %121 : vector<8x32xf32>
    %123 = arith.truncf %122 : vector<8x32xf32> to vector<8x32xbf16>
    %124 = arith.index_cast %90 : i32 to index
    %c0_40 = arith.constant 0 : index
    %125 = vector.load %arg14[%124, %c0_40] : memref<32x32xbf16, #tpu.memory_space<vmem>>, vector<8x32xbf16>
    tpu.vector_store %arg14[%124, %c0_40], %123 {strides = array<i32>} : memref<32x32xbf16, #tpu.memory_space<vmem>>, vector<8x32xbf16>,
    %c3_i32 = arith.constant 3 : i32
    %c8_i32_41 = arith.constant 8 : i32
    %126 = arith.muli %c3_i32, %c8_i32_41 : i32
    %127 = tpu.assume_multiple %126, 8 : i32
    %128 = arith.index_cast %127 : i32 to index
    %c0_42 = arith.constant 0 : index
    %129 = vector.load %arg15[%128, %c0_42] : memref<32x128xbf16, #tpu.memory_space<vmem>>, vector<8x128xbf16>
    %130 = arith.extf %129 : vector<8x128xbf16> to vector<8x128xf32>
    %131 = arith.truncf %122 : vector<8x32xf32> to vector<8x32xbf16>
    %c0_43 = arith.constant 0 : index
    %c0_44 = arith.constant 0 : index
    %132 = vector.load %arg5[%c0_43, %c0_44] : memref<32x128xbf16, #tpu.memory_space<vmem>>, vector<32x128xbf16>
    %cst_45 = arith.constant dense<0.000000e+00> : vector<8x128xf32>
    %133 = tpu.matmul %131, %132, %cst_45 {dimension_numbers = #tpu.dot_dimension_numbers<[1], [0], [0], [1], [0, 0, 1, 1], [], []>} : vector<8x32xbf16>, vector<32x128xbf16>, vector<8x128xf32> -> vector<8x128xf32>
    %134 = arith.addf %130, %133 : vector<8x128xf32>
    %135 = vector.extract_strided_slice %134 {offsets = [0, 0], sizes = [8, 32], strides = [1, 1]} : vector<8x128xf32> to vector<8x32xf32>
    %136 = arith.negf %135 : vector<8x32xf32>
    %137 = math.exp %136 : vector<8x32xf32>
    %cst_46 = arith.constant 1.000000e+00 : f32
    %138 = vector.broadcast %cst_46 : f32 to vector<8x32xf32>
    %139 = arith.addf %138, %137 : vector<8x32xf32>
    %140 = arith.divf %138, %139 : vector<8x32xf32>
    %141 = vector.extract_strided_slice %134 {offsets = [0, 32], sizes = [8, 32], strides = [1, 1]} : vector<8x128xf32> to vector<8x32xf32>
    %142 = arith.negf %141 : vector<8x32xf32>
    %143 = math.exp %142 : vector<8x32xf32>
    %cst_47 = arith.constant 1.000000e+00 : f32
    %144 = vector.broadcast %cst_47 : f32 to vector<8x32xf32>
    %145 = arith.addf %144, %143 : vector<8x32xf32>
    %146 = arith.divf %144, %145 : vector<8x32xf32>
    %147 = vector.extract_strided_slice %134 {offsets = [0, 64], sizes = [8, 32], strides = [1, 1]} : vector<8x128xf32> to vector<8x32xf32>
    %148 = math.tanh %147 : vector<8x32xf32>
    %149 = vector.extract_strided_slice %134 {offsets = [0, 96], sizes = [8, 32], strides = [1, 1]} : vector<8x128xf32> to vector<8x32xf32>
    %150 = arith.negf %149 : vector<8x32xf32>
    %151 = math.exp %150 : vector<8x32xf32>
    %cst_48 = arith.constant 1.000000e+00 : f32
    %152 = vector.broadcast %cst_48 : f32 to vector<8x32xf32>
    %153 = arith.addf %152, %151 : vector<8x32xf32>
    %154 = arith.divf %152, %153 : vector<8x32xf32>
    %155 = arith.mulf %146, %120 : vector<8x32xf32>
    %156 = arith.mulf %140, %148 : vector<8x32xf32>
    %157 = arith.addf %155, %156 : vector<8x32xf32>
    %158 = math.tanh %157 : vector<8x32xf32>
    %159 = arith.mulf %154, %158 : vector<8x32xf32>
    %160 = arith.truncf %159 : vector<8x32xf32> to vector<8x32xbf16>
    %161 = arith.index_cast %127 : i32 to index
    %c0_49 = arith.constant 0 : index
    %162 = vector.load %arg14[%161, %c0_49] : memref<32x32xbf16, #tpu.memory_space<vmem>>, vector<8x32xbf16>
    tpu.vector_store %arg14[%161, %c0_49], %160 {strides = array<i32>} : memref<32x32xbf16, #tpu.memory_space<vmem>>, vector<8x32xbf16>,
    %c4_i32 = arith.constant 4 : i32
    %c0_50 = arith.constant 0 : index
    %c0_51 = arith.constant 0 : index
    %c0_52 = arith.constant 0 : index
    %163 = vector.load %arg12[%c0_50, %c0_51, %c0_52] : memref<2x8x32xf32, #tpu.memory_space<vmem>>, vector<1x8x32xf32>
    %164 = vector.shape_cast %163 : vector<1x8x32xf32> to vector<8x32xf32>
    %165 = vector.shape_cast %159 : vector<8x32xf32> to vector<1x8x32xf32>
    tpu.vector_store %arg12[%c0_50, %c0_51, %c0_52], %165 {strides = array<i32>} : memref<2x8x32xf32, #tpu.memory_space<vmem>>, vector<1x8x32xf32>,
    %c0_53 = arith.constant 0 : index
    %c0_54 = arith.constant 0 : index
    %c0_55 = arith.constant 0 : index
    %166 = vector.load %arg13[%c0_53, %c0_54, %c0_55] : memref<2x8x32xf32, #tpu.memory_space<vmem>>, vector<1x8x32xf32>
    %167 = vector.shape_cast %166 : vector<1x8x32xf32> to vector<8x32xf32>
    %168 = vector.shape_cast %157 : vector<8x32xf32> to vector<1x8x32xf32>
    tpu.vector_store %arg13[%c0_53, %c0_54, %c0_55], %168 {strides = array<i32>} : memref<2x8x32xf32, #tpu.memory_space<vmem>>, vector<1x8x32xf32>,
    %c0_56 = arith.constant 0 : index
    %c0_57 = arith.constant 0 : index
    %169 = vector.load %arg14[%c0_56, %c0_57] : memref<32x32xbf16, #tpu.memory_space<vmem>>, vector<32x32xbf16>
    %c0_58 = arith.constant 0 : index
    %c0_59 = arith.constant 0 : index
    %170 = vector.load %arg4[%c0_58, %c0_59] : memref<32x128xbf16, #tpu.memory_space<vmem>>, vector<32x128xbf16>
    %cst_60 = arith.constant dense<0.000000e+00> : vector<32x128xf32>
    %171 = tpu.matmul %169, %170, %cst_60 {dimension_numbers = #tpu.dot_dimension_numbers<[1], [0], [0], [1], [0, 0, 1, 1], [], []>} : vector<32x32xbf16>, vector<32x128xbf16>, vector<32x128xf32> -> vector<32x128xf32>
    %c0_61 = arith.constant 0 : index
    %c0_62 = arith.constant 0 : index
    %172 = vector.load %arg8[%c0_61, %c0_62] : memref<1x128xf32, #tpu.memory_space<vmem>>, vector<1x128xf32>
    %173 = vector.broadcast %172 : vector<1x128xf32> to vector<32x128xf32>
    %174 = arith.addf %171, %173 : vector<32x128xf32>
    %175 = arith.truncf %174 : vector<32x128xf32> to vector<32x128xbf16>
    %c0_63 = arith.constant 0 : index
    %c0_64 = arith.constant 0 : index
    %176 = vector.load %arg15[%c0_63, %c0_64] : memref<32x128xbf16, #tpu.memory_space<vmem>>, vector<32x128xbf16>
    tpu.vector_store %arg15[%c0_63, %c0_64], %175 {strides = array<i32>} : memref<32x128xbf16, #tpu.memory_space<vmem>>, vector<32x128xbf16>,
    %c1 = arith.constant 1 : index
    %c0_65 = arith.constant 0 : index
    %c0_66 = arith.constant 0 : index
    %177 = vector.load %arg12[%c1, %c0_65, %c0_66] : memref<2x8x32xf32, #tpu.memory_space<vmem>>, vector<1x8x32xf32>
    %178 = vector.shape_cast %177 : vector<1x8x32xf32> to vector<8x32xf32>
    %c1_67 = arith.constant 1 : index
    %c0_68 = arith.constant 0 : index
    %c0_69 = arith.constant 0 : index
    %179 = vector.load %arg13[%c1_67, %c0_68, %c0_69] : memref<2x8x32xf32, #tpu.memory_space<vmem>>, vector<1x8x32xf32>
    %180 = vector.shape_cast %179 : vector<1x8x32xf32> to vector<8x32xf32>
    %c0_i32_70 = arith.constant 0 : i32
    %c8_i32_71 = arith.constant 8 : i32
    %181 = arith.muli %c0_i32_70, %c8_i32_71 : i32
    %182 = tpu.assume_multiple %181, 8 : i32
    %183 = arith.index_cast %182 : i32 to index
    %c0_72 = arith.constant 0 : index
    %184 = vector.load %arg15[%183, %c0_72] : memref<32x128xbf16, #tpu.memory_space<vmem>>, vector<8x128xbf16>
    %185 = arith.extf %184 : vector<8x128xbf16> to vector<8x128xf32>
    %186 = arith.truncf %178 : vector<8x32xf32> to vector<8x32xbf16>
    %c0_73 = arith.constant 0 : index
    %c0_74 = arith.constant 0 : index
    %187 = vector.load %arg6[%c0_73, %c0_74] : memref<32x128xbf16, #tpu.memory_space<vmem>>, vector<32x128xbf16>
    %cst_75 = arith.constant dense<0.000000e+00> : vector<8x128xf32>
    %188 = tpu.matmul %186, %187, %cst_75 {dimension_numbers = #tpu.dot_dimension_numbers<[1], [0], [0], [1], [0, 0, 1, 1], [], []>} : vector<8x32xbf16>, vector<32x128xbf16>, vector<8x128xf32> -> vector<8x128xf32>
    %189 = arith.addf %185, %188 : vector<8x128xf32>
    %190 = vector.extract_strided_slice %189 {offsets = [0, 0], sizes = [8, 32], strides = [1, 1]} : vector<8x128xf32> to vector<8x32xf32>
    %191 = arith.negf %190 : vector<8x32xf32>
    %192 = math.exp %191 : vector<8x32xf32>
    %cst_76 = arith.constant 1.000000e+00 : f32
    %193 = vector.broadcast %cst_76 : f32 to vector<8x32xf32>
    %194 = arith.addf %193, %192 : vector<8x32xf32>
    %195 = arith.divf %193, %194 : vector<8x32xf32>
    %196 = vector.extract_strided_slice %189 {offsets = [0, 32], sizes = [8, 32], strides = [1, 1]} : vector<8x128xf32> to vector<8x32xf32>
    %197 = arith.negf %196 : vector<8x32xf32>
    %198 = math.exp %197 : vector<8x32xf32>
    %cst_77 = arith.constant 1.000000e+00 : f32
    %199 = vector.broadcast %cst_77 : f32 to vector<8x32xf32>
    %200 = arith.addf %199, %198 : vector<8x32xf32>
    %201 = arith.divf %199, %200 : vector<8x32xf32>
    %202 = vector.extract_strided_slice %189 {offsets = [0, 64], sizes = [8, 32], strides = [1, 1]} : vector<8x128xf32> to vector<8x32xf32>
    %203 = math.tanh %202 : vector<8x32xf32>
    %204 = vector.extract_strided_slice %189 {offsets = [0, 96], sizes = [8, 32], strides = [1, 1]} : vector<8x128xf32> to vector<8x32xf32>
    %205 = arith.negf %204 : vector<8x32xf32>
    %206 = math.exp %205 : vector<8x32xf32>
    %cst_78 = arith.constant 1.000000e+00 : f32
    %207 = vector.broadcast %cst_78 : f32 to vector<8x32xf32>
    %208 = arith.addf %207, %206 : vector<8x32xf32>
    %209 = arith.divf %207, %208 : vector<8x32xf32>
    %210 = arith.mulf %201, %180 : vector<8x32xf32>
    %211 = arith.mulf %195, %203 : vector<8x32xf32>
    %212 = arith.addf %210, %211 : vector<8x32xf32>
    %213 = math.tanh %212 : vector<8x32xf32>
    %214 = arith.mulf %209, %213 : vector<8x32xf32>
    %c1_i32_79 = arith.constant 1 : i32
    %c8_i32_80 = arith.constant 8 : i32
    %215 = arith.muli %c1_i32_79, %c8_i32_80 : i32
    %216 = tpu.assume_multiple %215, 8 : i32
    %217 = arith.index_cast %216 : i32 to index
    %c0_81 = arith.constant 0 : index
    %218 = vector.load %arg15[%217, %c0_81] : memref<32x128xbf16, #tpu.memory_space<vmem>>, vector<8x128xbf16>
    %219 = arith.extf %218 : vector<8x128xbf16> to vector<8x128xf32>
    %220 = arith.truncf %214 : vector<8x32xf32> to vector<8x32xbf16>
    %c0_82 = arith.constant 0 : index
    %c0_83 = arith.constant 0 : index
    %221 = vector.load %arg6[%c0_82, %c0_83] : memref<32x128xbf16, #tpu.memory_space<vmem>>, vector<32x128xbf16>
    %cst_84 = arith.constant dense<0.000000e+00> : vector<8x128xf32>
    %222 = tpu.matmul %220, %221, %cst_84 {dimension_numbers = #tpu.dot_dimension_numbers<[1], [0], [0], [1], [0, 0, 1, 1], [], []>} : vector<8x32xbf16>, vector<32x128xbf16>, vector<8x128xf32> -> vector<8x128xf32>
    %223 = arith.addf %219, %222 : vector<8x128xf32>
    %224 = vector.extract_strided_slice %223 {offsets = [0, 0], sizes = [8, 32], strides = [1, 1]} : vector<8x128xf32> to vector<8x32xf32>
    %225 = arith.negf %224 : vector<8x32xf32>
    %226 = math.exp %225 : vector<8x32xf32>
    %cst_85 = arith.constant 1.000000e+00 : f32
    %227 = vector.broadcast %cst_85 : f32 to vector<8x32xf32>
    %228 = arith.addf %227, %226 : vector<8x32xf32>
    %229 = arith.divf %227, %228 : vector<8x32xf32>
    %230 = vector.extract_strided_slice %223 {offsets = [0, 32], sizes = [8, 32], strides = [1, 1]} : vector<8x128xf32> to vector<8x32xf32>
    %231 = arith.negf %230 : vector<8x32xf32>
    %232 = math.exp %231 : vector<8x32xf32>
    %cst_86 = arith.constant 1.000000e+00 : f32
    %233 = vector.broadcast %cst_86 : f32 to vector<8x32xf32>
    %234 = arith.addf %233, %232 : vector<8x32xf32>
    %235 = arith.divf %233, %234 : vector<8x32xf32>
    %236 = vector.extract_strided_slice %223 {offsets = [0, 64], sizes = [8, 32], strides = [1, 1]} : vector<8x128xf32> to vector<8x32xf32>
    %237 = math.tanh %236 : vector<8x32xf32>
    %238 = vector.extract_strided_slice %223 {offsets = [0, 96], sizes = [8, 32], strides = [1, 1]} : vector<8x128xf32> to vector<8x32xf32>
    %239 = arith.negf %238 : vector<8x32xf32>
    %240 = math.exp %239 : vector<8x32xf32>
    %cst_87 = arith.constant 1.000000e+00 : f32
    %241 = vector.broadcast %cst_87 : f32 to vector<8x32xf32>
    %242 = arith.addf %241, %240 : vector<8x32xf32>
    %243 = arith.divf %241, %242 : vector<8x32xf32>
    %244 = arith.mulf %235, %212 : vector<8x32xf32>
    %245 = arith.mulf %229, %237 : vector<8x32xf32>
    %246 = arith.addf %244, %245 : vector<8x32xf32>
    %247 = math.tanh %246 : vector<8x32xf32>
    %248 = arith.mulf %243, %247 : vector<8x32xf32>
    %c2_i32_88 = arith.constant 2 : i32
    %c8_i32_89 = arith.constant 8 : i32
    %249 = arith.muli %c2_i32_88, %c8_i32_89 : i32
    %250 = tpu.assume_multiple %249, 8 : i32
    %251 = arith.index_cast %250 : i32 to index
    %c0_90 = arith.constant 0 : index
    %252 = vector.load %arg15[%251, %c0_90] : memref<32x128xbf16, #tpu.memory_space<vmem>>, vector<8x128xbf16>
    %253 = arith.extf %252 : vector<8x128xbf16> to vector<8x128xf32>
    %254 = arith.truncf %248 : vector<8x32xf32> to vector<8x32xbf16>
    %c0_91 = arith.constant 0 : index
    %c0_92 = arith.constant 0 : index
    %255 = vector.load %arg6[%c0_91, %c0_92] : memref<32x128xbf16, #tpu.memory_space<vmem>>, vector<32x128xbf16>
    %cst_93 = arith.constant dense<0.000000e+00> : vector<8x128xf32>
    %256 = tpu.matmul %254, %255, %cst_93 {dimension_numbers = #tpu.dot_dimension_numbers<[1], [0], [0], [1], [0, 0, 1, 1], [], []>} : vector<8x32xbf16>, vector<32x128xbf16>, vector<8x128xf32> -> vector<8x128xf32>
    %257 = arith.addf %253, %256 : vector<8x128xf32>
    %258 = vector.extract_strided_slice %257 {offsets = [0, 0], sizes = [8, 32], strides = [1, 1]} : vector<8x128xf32> to vector<8x32xf32>
    %259 = arith.negf %258 : vector<8x32xf32>
    %260 = math.exp %259 : vector<8x32xf32>
    %cst_94 = arith.constant 1.000000e+00 : f32
    %261 = vector.broadcast %cst_94 : f32 to vector<8x32xf32>
    %262 = arith.addf %261, %260 : vector<8x32xf32>
    %263 = arith.divf %261, %262 : vector<8x32xf32>
    %264 = vector.extract_strided_slice %257 {offsets = [0, 32], sizes = [8, 32], strides = [1, 1]} : vector<8x128xf32> to vector<8x32xf32>
    %265 = arith.negf %264 : vector<8x32xf32>
    %266 = math.exp %265 : vector<8x32xf32>
    %cst_95 = arith.constant 1.000000e+00 : f32
    %267 = vector.broadcast %cst_95 : f32 to vector<8x32xf32>
    %268 = arith.addf %267, %266 : vector<8x32xf32>
    %269 = arith.divf %267, %268 : vector<8x32xf32>
    %270 = vector.extract_strided_slice %257 {offsets = [0, 64], sizes = [8, 32], strides = [1, 1]} : vector<8x128xf32> to vector<8x32xf32>
    %271 = math.tanh %270 : vector<8x32xf32>
    %272 = vector.extract_strided_slice %257 {offsets = [0, 96], sizes = [8, 32], strides = [1, 1]} : vector<8x128xf32> to vector<8x32xf32>
    %273 = arith.negf %272 : vector<8x32xf32>
    %274 = math.exp %273 : vector<8x32xf32>
    %cst_96 = arith.constant 1.000000e+00 : f32
    %275 = vector.broadcast %cst_96 : f32 to vector<8x32xf32>
    %276 = arith.addf %275, %274 : vector<8x32xf32>
    %277 = arith.divf %275, %276 : vector<8x32xf32>
    %278 = arith.mulf %269, %246 : vector<8x32xf32>
    %279 = arith.mulf %263, %271 : vector<8x32xf32>
    %280 = arith.addf %278, %279 : vector<8x32xf32>
    %281 = math.tanh %280 : vector<8x32xf32>
    %282 = arith.mulf %277, %281 : vector<8x32xf32>
    %c3_i32_97 = arith.constant 3 : i32
    %c8_i32_98 = arith.constant 8 : i32
    %283 = arith.muli %c3_i32_97, %c8_i32_98 : i32
    %284 = tpu.assume_multiple %283, 8 : i32
    %285 = arith.index_cast %284 : i32 to index
    %c0_99 = arith.constant 0 : index
    %286 = vector.load %arg15[%285, %c0_99] : memref<32x128xbf16, #tpu.memory_space<vmem>>, vector<8x128xbf16>
    %287 = arith.extf %286 : vector<8x128xbf16> to vector<8x128xf32>
    %288 = arith.truncf %282 : vector<8x32xf32> to vector<8x32xbf16>
    %c0_100 = arith.constant 0 : index
    %c0_101 = arith.constant 0 : index
    %289 = vector.load %arg6[%c0_100, %c0_101] : memref<32x128xbf16, #tpu.memory_space<vmem>>, vector<32x128xbf16>
    %cst_102 = arith.constant dense<0.000000e+00> : vector<8x128xf32>
    %290 = tpu.matmul %288, %289, %cst_102 {dimension_numbers = #tpu.dot_dimension_numbers<[1], [0], [0], [1], [0, 0, 1, 1], [], []>} : vector<8x32xbf16>, vector<32x128xbf16>, vector<8x128xf32> -> vector<8x128xf32>
    %291 = arith.addf %287, %290 : vector<8x128xf32>
    %292 = vector.extract_strided_slice %291 {offsets = [0, 0], sizes = [8, 32], strides = [1, 1]} : vector<8x128xf32> to vector<8x32xf32>
    %293 = arith.negf %292 : vector<8x32xf32>
    %294 = math.exp %293 : vector<8x32xf32>
    %cst_103 = arith.constant 1.000000e+00 : f32
    %295 = vector.broadcast %cst_103 : f32 to vector<8x32xf32>
    %296 = arith.addf %295, %294 : vector<8x32xf32>
    %297 = arith.divf %295, %296 : vector<8x32xf32>
    %298 = vector.extract_strided_slice %291 {offsets = [0, 32], sizes = [8, 32], strides = [1, 1]} : vector<8x128xf32> to vector<8x32xf32>
    %299 = arith.negf %298 : vector<8x32xf32>
    %300 = math.exp %299 : vector<8x32xf32>
    %cst_104 = arith.constant 1.000000e+00 : f32
    %301 = vector.broadcast %cst_104 : f32 to vector<8x32xf32>
    %302 = arith.addf %301, %300 : vector<8x32xf32>
    %303 = arith.divf %301, %302 : vector<8x32xf32>
    %304 = vector.extract_strided_slice %291 {offsets = [0, 64], sizes = [8, 32], strides = [1, 1]} : vector<8x128xf32> to vector<8x32xf32>
    %305 = math.tanh %304 : vector<8x32xf32>
    %306 = vector.extract_strided_slice %291 {offsets = [0, 96], sizes = [8, 32], strides = [1, 1]} : vector<8x128xf32> to vector<8x32xf32>
    %307 = arith.negf %306 : vector<8x32xf32>
    %308 = math.exp %307 : vector<8x32xf32>
    %cst_105 = arith.constant 1.000000e+00 : f32
    %309 = vector.broadcast %cst_105 : f32 to vector<8x32xf32>
    %310 = arith.addf %309, %308 : vector<8x32xf32>
    %311 = arith.divf %309, %310 : vector<8x32xf32>
    %312 = arith.mulf %303, %280 : vector<8x32xf32>
    %313 = arith.mulf %297, %305 : vector<8x32xf32>
    %314 = arith.addf %312, %313 : vector<8x32xf32>
    %315 = math.tanh %314 : vector<8x32xf32>
    %316 = arith.mulf %311, %315 : vector<8x32xf32>
    %c4_i32_106 = arith.constant 4 : i32
    %c1_107 = arith.constant 1 : index
    %c0_108 = arith.constant 0 : index
    %c0_109 = arith.constant 0 : index
    %317 = vector.load %arg12[%c1_107, %c0_108, %c0_109] : memref<2x8x32xf32, #tpu.memory_space<vmem>>, vector<1x8x32xf32>
    %318 = vector.shape_cast %317 : vector<1x8x32xf32> to vector<8x32xf32>
    %319 = vector.shape_cast %316 : vector<8x32xf32> to vector<1x8x32xf32>
    tpu.vector_store %arg12[%c1_107, %c0_108, %c0_109], %319 {strides = array<i32>} : memref<2x8x32xf32, #tpu.memory_space<vmem>>, vector<1x8x32xf32>,
    %c1_110 = arith.constant 1 : index
    %c0_111 = arith.constant 0 : index
    %c0_112 = arith.constant 0 : index
    %320 = vector.load %arg13[%c1_110, %c0_111, %c0_112] : memref<2x8x32xf32, #tpu.memory_space<vmem>>, vector<1x8x32xf32>
    %321 = vector.shape_cast %320 : vector<1x8x32xf32> to vector<8x32xf32>
    %322 = vector.shape_cast %314 : vector<8x32xf32> to vector<1x8x32xf32>
    tpu.vector_store %arg13[%c1_110, %c0_111, %c0_112], %322 {strides = array<i32>} : memref<2x8x32xf32, #tpu.memory_space<vmem>>, vector<1x8x32xf32>,
    %c1_i32_113 = arith.constant 1 : i32
    %323 = arith.cmpi eq, %arg1, %c1_i32_113 : i32
    %324 = arith.extui %323 : i1 to i32
    %c0_i32_114 = arith.constant 0 : i32
    %325 = arith.cmpi ne, %324, %c0_i32_114 : i32
    scf.if %325 {
      %c1_115 = arith.constant 1 : index
      %c0_116 = arith.constant 0 : index
      %c0_117 = arith.constant 0 : index
      %326 = vector.load %arg12[%c1_115, %c0_116, %c0_117] : memref<2x8x32xf32, #tpu.memory_space<vmem>>, vector<1x8x32xf32>
      %327 = vector.shape_cast %326 : vector<1x8x32xf32> to vector<8x32xf32>
      %328 = arith.truncf %327 : vector<8x32xf32> to vector<8x32xbf16>
      %c0_118 = arith.constant 0 : index
      %c0_119 = arith.constant 0 : index
      %329 = vector.load %arg9[%c0_118, %c0_119] : memref<32x128xbf16, #tpu.memory_space<vmem>>, vector<32x128xbf16>
      %cst_120 = arith.constant dense<0.000000e+00> : vector<8x128xf32>
      %330 = tpu.matmul %328, %329, %cst_120 {dimension_numbers = #tpu.dot_dimension_numbers<[1], [0], [0], [1], [0, 0, 1, 1], [], []>} : vector<8x32xbf16>, vector<32x128xbf16>, vector<8x128xf32> -> vector<8x128xf32>
      %c0_121 = arith.constant 0 : index
      %c0_122 = arith.constant 0 : index
      %331 = vector.load %arg10[%c0_121, %c0_122] : memref<1x128xf32, #tpu.memory_space<vmem>>, vector<1x128xf32>
      %332 = vector.broadcast %331 : vector<1x128xf32> to vector<8x128xf32>
      %333 = arith.addf %330, %332 : vector<8x128xf32>
      %c0_123 = arith.constant 0 : index
      %c0_124 = arith.constant 0 : index
      %334 = vector.load %arg11[%c0_123, %c0_124] : memref<8x128xf32, #tpu.memory_space<vmem>>, vector<8x128xf32>
      tpu.vector_store %arg11[%c0_123, %c0_124], %333 {strides = array<i32>} : memref<8x128xf32, #tpu.memory_space<vmem>>, vector<8x128xf32>,
    } else {
    }
    return
  }
  func.func @transform_0(%arg0: i32, %arg1: i32) -> (i32, i32) {
    %c2_i32 = arith.constant 2 : i32
    %0 = arith.muli %arg0, %c2_i32 : i32
    %1 = arith.addi %0, %arg1 : i32
    %c0_i32 = arith.constant 0 : i32
    %c0_i32_0 = arith.constant 0 : i32
    return %1, %c0_i32 : i32, i32
  }
  func.func @transform_1(%arg0: i32, %arg1: i32) -> (i32, i32) {
    %c0_i32 = arith.constant 0 : i32
    %c0_i32_0 = arith.constant 0 : i32
    %c0_i32_1 = arith.constant 0 : i32
    return %c0_i32, %c0_i32_0 : i32, i32
  }
  func.func @transform_2(%arg0: i32, %arg1: i32) -> (i32, i32) {
    %c0_i32 = arith.constant 0 : i32
    %c0_i32_0 = arith.constant 0 : i32
    %c0_i32_1 = arith.constant 0 : i32
    return %c0_i32, %c0_i32_0 : i32, i32
  }
  func.func @transform_3(%arg0: i32, %arg1: i32) -> (i32, i32) {
    %c0_i32 = arith.constant 0 : i32
    %c0_i32_0 = arith.constant 0 : i32
    %c0_i32_1 = arith.constant 0 : i32
    return %c0_i32, %c0_i32_0 : i32, i32
  }
  func.func @transform_4(%arg0: i32, %arg1: i32) -> (i32, i32) {
    %c0_i32 = arith.constant 0 : i32
    %c0_i32_0 = arith.constant 0 : i32
    %c0_i32_1 = arith.constant 0 : i32
    return %c0_i32, %c0_i32_0 : i32, i32
  }
  func.func @transform_5(%arg0: i32, %arg1: i32) -> (i32, i32) {
    %c0_i32 = arith.constant 0 : i32
    %c0_i32_0 = arith.constant 0 : i32
    %c0_i32_1 = arith.constant 0 : i32
    return %c0_i32, %c0_i32_0 : i32, i32
  }
  func.func @transform_6(%arg0: i32, %arg1: i32) -> (i32, i32) {
    %c0_i32 = arith.constant 0 : i32
    %c0_i32_0 = arith.constant 0 : i32
    %c0_i32_1 = arith.constant 0 : i32
    return %c0_i32, %c0_i32_0 : i32, i32
  }
  func.func @transform_7(%arg0: i32, %arg1: i32) -> (i32, i32) {
    %c0_i32 = arith.constant 0 : i32
    %c0_i32_0 = arith.constant 0 : i32
    %c0_i32_1 = arith.constant 0 : i32
    return %c0_i32, %c0_i32_0 : i32, i32
  }
  func.func @transform_8(%arg0: i32, %arg1: i32) -> (i32, i32) {
    %c0_i32 = arith.constant 0 : i32
    %c0_i32_0 = arith.constant 0 : i32
    %c0_i32_1 = arith.constant 0 : i32
    return %c0_i32, %c0_i32_0 : i32, i32
  }
  func.func @transform_9(%arg0: i32, %arg1: i32) -> (i32, i32) {
    %c0_i32 = arith.constant 0 : i32
    %c0_i32_0 = arith.constant 0 : i32
    return %arg0, %c0_i32 : i32, i32
  }
}

</mosaic_0001>

<llo_original>
// kernel: _lambda_.1
$region0: #{_lambda_.1}
  #allocation0 [shape = 'u32[]', space=smem, size = 0x4, offset = 0x4, fixed_abs, tag = 'smem constant byte address 0x4 - core index']
  #allocation1 [shape = 'u32[72,128]{1,0:T(1,128)}', space=vmem, size = 0x9000, scoped, tag = 'internal scratch']
  #allocation2 [shape = 'f32[2,8,32]{2,1,0:T(8,128)}', space=vmem, size = 0x2000, scoped, tag = 'scratch operand']
  #allocation3 [shape = 'f32[2,8,32]{2,1,0:T(8,128)}', space=vmem, size = 0x2000, scoped, tag = 'scratch operand']
  #allocation4 [shape = 'bf16[32,32]{1,0:T(8,128)(2,1)}', space=vmem, size = 0x2000, scoped, tag = 'scratch operand']
  #allocation5 [shape = 'bf16[32,128]{1,0:T(8,128)(2,1)}', space=vmem, size = 0x2000, scoped, tag = 'scratch operand']
  %s0 = inlined_call_operand.vmem [shape: bf16[64,16], index: 0, kind: input, shape index: {}]
  %s1 = inlined_call_operand.vmem [shape: bf16[16,128], index: 1, kind: input, shape index: {}]
  %s2 = inlined_call_operand.vmem [shape: bf16[32,128], index: 2, kind: input, shape index: {}]
  %s3 = inlined_call_operand.vmem [shape: bf16[32,128], index: 3, kind: input, shape index: {}]
  %s4 = inlined_call_operand.vmem [shape: bf16[32,128], index: 4, kind: input, shape index: {}]
  %s5 = inlined_call_operand.vmem [shape: f32[1,128], index: 5, kind: input, shape index: {}]
  %s6 = inlined_call_operand.vmem [shape: f32[1,128], index: 6, kind: input, shape index: {}]
  %s7 = inlined_call_operand.vmem [shape: bf16[32,128], index: 7, kind: input, shape index: {}]
  %s8 = inlined_call_operand.vmem [shape: f32[1,128], index: 8, kind: input, shape index: {}]
  %s9 = inlined_call_operand.vmem [shape: f32[8,128], index: 9, kind: output, shape index: {}]
  %s10 = sld [smem:[#allocation0]]
  $region77: #{_lambda_.1} parent=0
    _
  %s12 = ssub.s32 1, %s10
  %s13 = scalar_select 0, %s12, %s10
  loop: start=0, step=1, limit=4
  $region2: #{_lambda_.1} parent=0 // loop_pre_header
    _
  $region3: #{_lambda_.1} parent=0 // loop_header
    %s15 = sphi 0, %s19
    %p16 = scmp.ge.s32.totalorder %s15, 4
    %s22 = sphi 0, %s34
    %s23 = sphi 0, %s30
    %s24 = sphi 0, %s22
    %s25 = sphi 0, %s23
    %s26 = sphi 0, %s24
    %s27 = sphi 0, %s25
    %s41 = sphi 0, %s43
    %s44 = sphi 0, %s41
    %s45 = sphi 0, %s44
    %s61 = sphi 0, %s45
    %s65 = sphi 0, %s65
    %s67 = sphi 0, %s65
    %s68 = sphi 0, %s67
    %s82 = sphi 0, %s68
    %s86 = sphi 0, %s86
    %s88 = sphi 0, %s86
    %s89 = sphi 0, %s88
    %s103 = sphi 0, %s89
    %s107 = sphi 0, %s107
    %s109 = sphi 0, %s107
    %s110 = sphi 0, %s109
    %s124 = sphi 0, %s110
    %s128 = sphi 0, %s128
    %s130 = sphi 0, %s128
    %s131 = sphi 0, %s130
    %s145 = sphi 0, %s131
    %s149 = sphi 0, %s149
    %s151 = sphi 0, %s149
    %s152 = sphi 0, %s151
    %s166 = sphi 0, %s152
    %s170 = sphi 0, %s170
    %s172 = sphi 0, %s170
    %s173 = sphi 0, %s172
    %s187 = sphi 0, %s173
    %s191 = sphi 0, %s191
    %s193 = sphi 0, %s191
    %s194 = sphi 0, %s193
    %s208 = sphi 0, %s194
    %s212 = sphi 0, %s212
    %s214 = sphi 0, %s212
    %s215 = sphi 0, %s214
    %s229 = sphi 0, %s215
    %s235 = sphi 0, %s237
    %s238 = sphi 0, %s235
    %s239 = sphi 0, %s238
    %s255 = sphi 0, %s239
  $region4: #{_lambda_.1} parent=0 // loop_header_branch
    %18 = sbr.rel (%p16) target = $region8
  $region5: #{_lambda_.1} parent=0 // loop_body
    %s20 = ssub.s32 %s15, 1
    %s21 = ssub.s32 %s15, 2
    %s28 = sadd.s32 1, %s23
    %p29 = scmp.ge.s32.totalorder %s28, 2
    %s30 = scalar_select %p29, 0, %s28
    %s31 = sadd.s32 1, %s22
    %s32 = scalar_select %p29, %s31, %s22
    %p33 = scmp.ge.s32.totalorder %s32, 1
    %s34 = scalar_select %p33, 0, %s32
    %s35 = smul.u32 %s22, 2
    %s36 = sadd.s32 %s35, %s23
    %s37 = smul.u32 %s34, 2
    %s38 = sadd.s32 %s37, %s30
    %s39 = ssub.s32 %s36, %s38
    %p40 = scmp.eq.s32.totalorder %s39, 0
    %s42 = sadd.s32 %s41, 1
    %s43 = scalar_select %p40, %s41, %s42
    %p46 = pneg %p40
    %p47 = scmp.eq.s32.totalorder %s15, 1
    %p48 = por %p46, %p47
    %p49 = scmp.ne.s32.totalorder %s41, %s44
    %p50 = scmp.eq.s32.totalorder %s15, 0
    %p51 = por %p49, %p50
    %p52 = scmp.ne.s32.totalorder %s41, %s44
    %p53 = scmp.eq.s32.totalorder %s20, 1
    %p54 = por %p52, %p53
    %p55 = scmp.ne.s32.totalorder %s44, %s45
    %p56 = scmp.eq.s32.totalorder %s20, 0
    %p57 = por %p55, %p56
    %p58 = scmp.ne.s32.totalorder %s44, %s45
    %p59 = scmp.eq.s32.totalorder %s21, 1
    %p60 = por %p58, %p59
    %p62 = scmp.ne.s32.totalorder %s45, %s61
    %p63 = scmp.eq.s32.totalorder %s21, 0
    %p64 = por %p62, %p63
    %s66 = sadd.s32 %s65, 1
    %p69 = scmp.eq.s32.totalorder %s15, 1
    %p70 = scmp.ne.s32.totalorder %s65, %s67
    %p71 = scmp.eq.s32.totalorder %s15, 0
    %p72 = por %p70, %p71
    %p73 = scmp.ne.s32.totalorder %s65, %s67
    %p74 = scmp.eq.s32.totalorder %s20, 1
    %p75 = por %p73, %p74
    %p76 = scmp.ne.s32.totalorder %s67, %s68
    %p77 = scmp.eq.s32.totalorder %s20, 0
    %p78 = por %p76, %p77
    %p79 = scmp.ne.s32.totalorder %s67, %s68
    %p80 = scmp.eq.s32.totalorder %s21, 1
    %p81 = por %p79, %p80
    %p83 = scmp.ne.s32.totalorder %s68, %s82
    %p84 = scmp.eq.s32.totalorder %s21, 0
    %p85 = por %p83, %p84
    %s87 = sadd.s32 %s86, 1
    %p90 = scmp.eq.s32.totalorder %s15, 1
    %p91 = scmp.ne.s32.totalorder %s86, %s88
    %p92 = scmp.eq.s32.totalorder %s15, 0
    %p93 = por %p91, %p92
    %p94 = scmp.ne.s32.totalorder %s86, %s88
    %p95 = scmp.eq.s32.totalorder %s20, 1
    %p96 = por %p94, %p95
    %p97 = scmp.ne.s32.totalorder %s88, %s89
    %p98 = scmp.eq.s32.totalorder %s20, 0
    %p99 = por %p97, %p98
    %p100 = scmp.ne.s32.totalorder %s88, %s89
    %p101 = scmp.eq.s32.totalorder %s21, 1
    %p102 = por %p100, %p101
    %p104 = scmp.ne.s32.totalorder %s89, %s103
    %p105 = scmp.eq.s32.totalorder %s21, 0
    %p106 = por %p104, %p105
    %s108 = sadd.s32 %s107, 1
    %p111 = scmp.eq.s32.totalorder %s15, 1
    %p112 = scmp.ne.s32.totalorder %s107, %s109
    %p113 = scmp.eq.s32.totalorder %s15, 0
    %p114 = por %p112, %p113
    %p115 = scmp.ne.s32.totalorder %s107, %s109
    %p116 = scmp.eq.s32.totalorder %s20, 1
    %p117 = por %p115, %p116
    %p118 = scmp.ne.s32.totalorder %s109, %s110
    %p119 = scmp.eq.s32.totalorder %s20, 0
    %p120 = por %p118, %p119
    %p121 = scmp.ne.s32.totalorder %s109, %s110
    %p122 = scmp.eq.s32.totalorder %s21, 1
    %p123 = por %p121, %p122
    %p125 = scmp.ne.s32.totalorder %s110, %s124
    %p126 = scmp.eq.s32.totalorder %s21, 0
    %p127 = por %p125, %p126
    %s129 = sadd.s32 %s128, 1
    %p132 = scmp.eq.s32.totalorder %s15, 1
    %p133 = scmp.ne.s32.totalorder %s128, %s130
    %p134 = scmp.eq.s32.totalorder %s15, 0
    %p135 = por %p133, %p134
    %p136 = scmp.ne.s32.totalorder %s128, %s130
    %p137 = scmp.eq.s32.totalorder %s20, 1
    %p138 = por %p136, %p137
    %p139 = scmp.ne.s32.totalorder %s130, %s131
    %p140 = scmp.eq.s32.totalorder %s20, 0
    %p141 = por %p139, %p140
    %p142 = scmp.ne.s32.totalorder %s130, %s131
    %p143 = scmp.eq.s32.totalorder %s21, 1
    %p144 = por %p142, %p143
    %p146 = scmp.ne.s32.totalorder %s131, %s145
    %p147 = scmp.eq.s32.totalorder %s21, 0
    %p148 = por %p146, %p147
    %s150 = sadd.s32 %s149, 1
    %p153 = scmp.eq.s32.totalorder %s15, 1
    %p154 = scmp.ne.s32.totalorder %s149, %s151
    %p155 = scmp.eq.s32.totalorder %s15, 0
    %p156 = por %p154, %p155
    %p157 = scmp.ne.s32.totalorder %s149, %s151
    %p158 = scmp.eq.s32.totalorder %s20, 1
    %p159 = por %p157, %p158
    %p160 = scmp.ne.s32.totalorder %s151, %s152
    %p161 = scmp.eq.s32.totalorder %s20, 0
    %p162 = por %p160, %p161
    %p163 = scmp.ne.s32.totalorder %s151, %s152
    %p164 = scmp.eq.s32.totalorder %s21, 1
    %p165 = por %p163, %p164
    %p167 = scmp.ne.s32.totalorder %s152, %s166
    %p168 = scmp.eq.s32.totalorder %s21, 0
    %p169 = por %p167, %p168
    %s171 = sadd.s32 %s170, 1
    %p174 = scmp.eq.s32.totalorder %s15, 1
    %p175 = scmp.ne.s32.totalorder %s170, %s172
    %p176 = scmp.eq.s32.totalorder %s15, 0
    %p177 = por %p175, %p176
    %p178 = scmp.ne.s32.totalorder %s170, %s172
    %p179 = scmp.eq.s32.totalorder %s20, 1
    %p180 = por %p178, %p179
    %p181 = scmp.ne.s32.totalorder %s172, %s173
    %p182 = scmp.eq.s32.totalorder %s20, 0
    %p183 = por %p181, %p182
    %p184 = scmp.ne.s32.totalorder %s172, %s173
    %p185 = scmp.eq.s32.totalorder %s21, 1
    %p186 = por %p184, %p185
    %p188 = scmp.ne.s32.totalorder %s173, %s187
    %p189 = scmp.eq.s32.totalorder %s21, 0
    %p190 = por %p188, %p189
    %s192 = sadd.s32 %s191, 1
    %p195 = scmp.eq.s32.totalorder %s15, 1
    %p196 = scmp.ne.s32.totalorder %s191, %s193
    %p197 = scmp.eq.s32.totalorder %s15, 0
    %p198 = por %p196, %p197
    %p199 = scmp.ne.s32.totalorder %s191, %s193
    %p200 = scmp.eq.s32.totalorder %s20, 1
    %p201 = por %p199, %p200
    %p202 = scmp.ne.s32.totalorder %s193, %s194
    %p203 = scmp.eq.s32.totalorder %s20, 0
    %p204 = por %p202, %p203
    %p205 = scmp.ne.s32.totalorder %s193, %s194
    %p206 = scmp.eq.s32.totalorder %s21, 1
    %p207 = por %p205, %p206
    %p209 = scmp.ne.s32.totalorder %s194, %s208
    %p210 = scmp.eq.s32.totalorder %s21, 0
    %p211 = por %p209, %p210
    %s213 = sadd.s32 %s212, 1
    %p216 = scmp.eq.s32.totalorder %s15, 1
    %p217 = scmp.ne.s32.totalorder %s212, %s214
    %p218 = scmp.eq.s32.totalorder %s15, 0
    %p219 = por %p217, %p218
    %p220 = scmp.ne.s32.totalorder %s212, %s214
    %p221 = scmp.eq.s32.totalorder %s20, 1
    %p222 = por %p220, %p221
    %p223 = scmp.ne.s32.totalorder %s214, %s215
    %p224 = scmp.eq.s32.totalorder %s20, 0
    %p225 = por %p223, %p224
    %p226 = scmp.ne.s32.totalorder %s214, %s215
    %p227 = scmp.eq.s32.totalorder %s21, 1
    %p228 = por %p226, %p227
    %p230 = scmp.ne.s32.totalorder %s215, %s229
    %p231 = scmp.eq.s32.totalorder %s21, 0
    %p232 = por %p230, %p231
    %s233 = ssub.s32 %s22, %s34
    %p234 = scmp.eq.s32.totalorder %s233, 0
    %s236 = sadd.s32 %s235, 1
    %s237 = scalar_select %p234, %s235, %s236
    %p240 = pneg %p234
    %p241 = scmp.eq.s32.totalorder %s15, 1
    %p242 = por %p240, %p241
    %p243 = scmp.ne.s32.totalorder %s235, %s238
    %p244 = scmp.eq.s32.totalorder %s15, 0
    %p245 = por %p243, %p244
    %p246 = scmp.ne.s32.totalorder %s235, %s238
    %p247 = scmp.eq.s32.totalorder %s20, 1
    %p248 = por %p246, %p247
    %p249 = scmp.ne.s32.totalorder %s238, %s239
    %p250 = scmp.eq.s32.totalorder %s20, 0
    %p251 = por %p249, %p250
    %p252 = scmp.ne.s32.totalorder %s238, %s239
    %p253 = scmp.eq.s32.totalorder %s21, 1
    %p254 = por %p252, %p253
    %p256 = scmp.ne.s32.totalorder %s239, %s255
    %p257 = scmp.eq.s32.totalorder %s21, 0
    %p258 = por %p256, %p257
    %p259 = scmp.le.s32.totalorder 1, %s15
    %p260 = scmp.lt.s32.totalorder %s15, 3
    %p261 = pnand %p259, %p260
    %p262 = pneg %p261
    // Predicated region
    $region9: #{_lambda_.1} parent=5 // pred_check
      _
    $region10: #{_lambda_.1} parent=5 // pred_check_branch
      %264 = sbr.rel (%p261) target = $region12
    $region11: #{_lambda_.1} parent=5 // pred_region
      %s265 = ssub.s32 %s15, 1
      // Predicated region
      $region13: #{_lambda_.1} parent=11 // pred_check
        %p266 = pneg %p78
      $region14: #{_lambda_.1} parent=11 // pred_check_branch
        %268 = sbr.rel (%p266) target = $region16
      $region15: #{_lambda_.1} parent=11 // pred_region
        _
      $region16: #{_lambda_.1} parent=11 // pred_fallthru
        _
      // Predicated region
      $region17: #{_lambda_.1} parent=11 // pred_check
        %p269 = pneg %p99
      $region18: #{_lambda_.1} parent=11 // pred_check_branch
        %271 = sbr.rel (%p269) target = $region20
      $region19: #{_lambda_.1} parent=11 // pred_region
        _
      $region20: #{_lambda_.1} parent=11 // pred_fallthru
        _
      // Predicated region
      $region21: #{_lambda_.1} parent=11 // pred_check
        %p272 = pneg %p120
      $region22: #{_lambda_.1} parent=11 // pred_check_branch
        %274 = sbr.rel (%p272) target = $region24
      $region23: #{_lambda_.1} parent=11 // pred_region
        _
      $region24: #{_lambda_.1} parent=11 // pred_fallthru
        _
      // Predicated region
      $region25: #{_lambda_.1} parent=11 // pred_check
        %p275 = pneg %p141
      $region26: #{_lambda_.1} parent=11 // pred_check_branch
        %277 = sbr.rel (%p275) target = $region28
      $region27: #{_lambda_.1} parent=11 // pred_region
        _
      $region28: #{_lambda_.1} parent=11 // pred_fallthru
        _
      // Predicated region
      $region29: #{_lambda_.1} parent=11 // pred_check
        %p278 = pneg %p162
      $region30: #{_lambda_.1} parent=11 // pred_check_branch
        %280 = sbr.rel (%p278) target = $region32
      $region31: #{_lambda_.1} parent=11 // pred_region
        _
      $region32: #{_lambda_.1} parent=11 // pred_fallthru
        _
      // Predicated region
      $region33: #{_lambda_.1} parent=11 // pred_check
        %p281 = pneg %p183
      $region34: #{_lambda_.1} parent=11 // pred_check_branch
        %283 = sbr.rel (%p281) target = $region36
      $region35: #{_lambda_.1} parent=11 // pred_region
        _
      $region36: #{_lambda_.1} parent=11 // pred_fallthru
        _
      // Predicated region
      $region37: #{_lambda_.1} parent=11 // pred_check
        %p284 = pneg %p204
      $region38: #{_lambda_.1} parent=11 // pred_check_branch
        %286 = sbr.rel (%p284) target = $region40
      $region39: #{_lambda_.1} parent=11 // pred_region
        _
      $region40: #{_lambda_.1} parent=11 // pred_fallthru
        _
      // Predicated region
      $region41: #{_lambda_.1} parent=11 // pred_check
        %p287 = pneg %p225
      $region42: #{_lambda_.1} parent=11 // pred_check_branch
        %289 = sbr.rel (%p287) target = $region44
      $region43: #{_lambda_.1} parent=11 // pred_region
        _
      $region44: #{_lambda_.1} parent=11 // pred_fallthru
        _
    $region12: #{_lambda_.1} parent=5 // pred_fallthru
      _
    %p290 = scmp.lt.s32.totalorder %s15, 2
    // Predicated region
    $region45: #{_lambda_.1} parent=5 // pred_check
      %p291 = pneg %p290
    $region46: #{_lambda_.1} parent=5 // pred_check_branch
      %293 = sbr.rel (%p291) target = $region48
    $region47: #{_lambda_.1} parent=5 // pred_region
      // Predicated region
      $region49: #{_lambda_.1} parent=47 // pred_check
        %p294 = pneg %p51
      $region50: #{_lambda_.1} parent=47 // pred_check_branch
        %296 = sbr.rel (%p294) target = $region52
      $region51: #{_lambda_.1} parent=47 // pred_region
        %s297 = smul.u32 %s22, 2
        %s298 = sadd.s32 %s297, %s23
        %s299 = smul.u32 4, %s298
        %p300 = scmp.lt.s32.totalorder %s299, 7
        %s301 = scalar_select %p300, %s299, 7
        %s302 = smul.addr %s301, 4
        %s303 = scalar_lea.vmem %s0, %s302
        %s304 = smul.u32 %s22, 2
        %s305 = sadd.s32 %s304, %s23
        %s306 = smul.u32 4, %s305
      $region52: #{_lambda_.1} parent=47 // pred_fallthru
        _
    $region48: #{_lambda_.1} parent=5 // pred_fallthru
      _
    %p307 = scmp.le.s32.totalorder 1, %s15
    %p308 = scmp.lt.s32.totalorder %s15, 3
    %p309 = pnand %p307, %p308
    %p310 = pneg %p309
    // Predicated region
    $region53: #{_lambda_.1} parent=5 // pred_check
      _
    $region54: #{_lambda_.1} parent=5 // pred_check_branch
      %312 = sbr.rel (%p309) target = $region56
    $region55: #{_lambda_.1} parent=5 // pred_region
      %s313 = ssub.s32 %s15, 1
      %s314 = smul.u32 %s24, 2
      %s315 = sadd.s32 %s314, %s25
      %s316 = smul.u32 4, %s315
      %p317 = scmp.lt.s32.totalorder %s316, 7
      %s318 = scalar_select %p317, %s316, 7
      %s319 = smul.addr %s318, 4
      %s320 = scalar_lea.vmem %s0, %s319
      %p321 = pneg %p57
      %p322 = pneg %p54
      %p323 = pneg %p78
      %p324 = pneg %p75
      %p325 = pneg %p99
      %p326 = pneg %p96
      %p327 = pneg %p120
      %p328 = pneg %p117
      %p329 = pneg %p141
      %p330 = pneg %p138
      %p331 = pneg %p162
      %p332 = pneg %p159
      %p333 = pneg %p183
      %p334 = pneg %p180
      %p335 = pneg %p204
      %p336 = pneg %p201
      %p337 = pneg %p225
      %p338 = pneg %p222
      %p339 = pneg %p251
      %p340 = pneg %p248
      %p341 = scmp.lt.s32.totalorder %s24, 0
      %s342 = scalar_select %p341, %s24, 0
      %s343 = smul.addr %s342, 8
      %s344 = scalar_lea.vmem %s9, %s343
      %s345 = smul.u32 %s24, 2
      %s346 = sadd.s32 %s345, %s25
      %s347 = smul.u32 4, %s346
      %p348 = scmp.lt.s32.totalorder %s347, 7
      %s349 = scalar_select %p348, %s347, 7
      %s350 = smul.addr %s349, 4
      %s351 = scalar_lea.vmem %s0, %s350
      %s352 = smul.u32 %s24, 2
      %s353 = sadd.s32 %s352, %s25
      %s354 = smul.u32 4, %s353
      %p355 = scmp.lt.s32.totalorder %s24, 0
      %s356 = scalar_select %p355, %s24, 0
      %s357 = smul.addr %s356, 8
      %s358 = scalar_lea.vmem %s9, %s357
      %p360 = scmp.eq.s32.totalorder %s25, 0
      // Predicated region
      $region57: #{_lambda_.1} parent=55 // pred_check
        %p361 = pneg %p360
      $region58: #{_lambda_.1} parent=55 // pred_check_branch
        %363 = sbr.rel (%p361) target = $region60
      $region59: #{_lambda_.1} parent=55 // pred_region
        %vm364 = vcmask 261120
        %365 = vst.msk [vmem:[#allocation2] sm:$0xff] %vm364, 0.0
        %366 = vst.msk [vmem:[#allocation2 + $0x8] sm:$0xff] %vm364, 0.0
        %367 = vst.msk [vmem:[#allocation3] sm:$0xff] %vm364, 0.0
        %368 = vst.msk [vmem:[#allocation3 + $0x8] sm:$0xff] %vm364, 0.0
      $region60: #{_lambda_.1} parent=55 // pred_fallthru
        _
      %v369 = vld [vmem:[%s351] sm:$0xf]
      %v370 = vld [vmem:[%s351 + $0x4] sm:$0xf]
      %v371 = vld [vmem:[%s351 + $0x8] sm:$0xf]
      %v372 = vld [vmem:[%s351 + $0xc] sm:$0xf]
      %v373 = vld [vmem:[%s1] sm:$0xf]
      %v374 = vld [vmem:[%s1 + $0x4] sm:$0xf]
      %v375 = vld [vmem:[%s5] sm:$0x1]
      %v377 = vperm.slane %v375, 0
      %v383 = vunpack.c.l.b16 %v369
      %v384 = vunpack.c.l.b16 %v370
      %v385 = vunpack.c.l.b16 %v371
      %v386 = vunpack.c.l.b16 %v372
      %v387 = vpack.c.b16 %v384, %v383
      %v388 = vpack.c.b16 %v386, %v385
      %v391 = vunpack.c.l.b16 %v373
      %v392 = vunpack.c.l.b16 %v374
      %v393 = vpack.c.b16 %v392, %v391
      %vm395 = vcmask 130048
      %v397 = vsel %vm395, %v387, 0
      %v400 = vsel %vm395, %v388, 0
      %402 = vmatpush.bf16.msra.mxu0 0
      %403 = vmatpush.bf16.msra.mxu0 0
      %404 = vmatpush.bf16.msra.mxu0 0
      %405 = vmatpush.bf16.msra.mxu0 0
      %406 = vmatpush.bf16.msra.mxu0 0
      %407 = vmatpush.bf16.msra.mxu0 0
      %408 = vmatpush.bf16.msra.mxu0 0
      %409 = vmatpush.bf16.msra.mxu0 %v393
      %410 = vmatmul.bf16.gmra.mxu0 %v397
      %v411 = vpop.f32.mrf.mxu0
      %v412 = vadd.f32 %v377, %v411
      %v413 = vpop.f32.mrf.mxu0
      %v414 = vadd.f32 %v377, %v413
      %415 = vmatmul.bf16.gmra.mxu0 %v400
      %v416 = vpop.f32.mrf.mxu0
      %v417 = vadd.f32 %v377, %v416
      %v418 = vpop.f32.mrf.mxu0
      %v419 = vadd.f32 %v377, %v418
      %420 = vdwg.mxu0
      %v421 = vpack.c.bf16 %v412, %v412
      %v422 = vpack.c.bf16 %v414, %v414
      %v423 = vpack.c.bf16 %v417, %v417
      %v424 = vpack.c.bf16 %v419, %v419
      %425 = vst [vmem:[#allocation5] sm:$0xf] %v421
      %426 = vst [vmem:[#allocation5 + $0x4] sm:$0xf] %v422
      %427 = vst [vmem:[#allocation5 + $0x8] sm:$0xf] %v423
      %428 = vst [vmem:[#allocation5 + $0xc] sm:$0xf] %v424
      %v429 = vld [vmem:[#allocation2] sm:$0xff]
      %v430 = vld [vmem:[#allocation3] sm:$0xff]
      %v431 = vld [vmem:[#allocation5] sm:$0xf]
      %v432 = vunpack.c.l.bf16 %v431
      %v433 = vpack.c.bf16 %v429, %v429
      %v434 = vld [vmem:[%s3] sm:$0xf]
      %v435 = vld [vmem:[%s3 + $0x4] sm:$0xf]
      %v436 = vld [vmem:[%s3 + $0x8] sm:$0xf]
      %v437 = vld [vmem:[%s3 + $0xc] sm:$0xf]
      %v442 = vunpack.c.l.b16 %v434
      %v443 = vunpack.c.l.b16 %v435
      %v444 = vunpack.c.l.b16 %v436
      %v445 = vunpack.c.l.b16 %v437
      %v446 = vpack.c.b16 %v443, %v442
      %v447 = vpack.c.b16 %v445, %v444
      %vm450 = vcmask 261120
      %v452 = vsel %vm450, %v433, 0
      %454 = vmatpush.bf16.msra.mxu0 0
      %455 = vmatpush.bf16.msra.mxu0 0
      %456 = vmatpush.bf16.msra.mxu0 0
      %457 = vmatpush.bf16.msra.mxu0 0
      %458 = vmatpush.bf16.msra.mxu0 0
      %459 = vmatpush.bf16.msra.mxu0 0
      %460 = vmatpush.bf16.msra.mxu0 %v447
      %461 = vmatpush.bf16.msra.mxu0 %v446
      %462 = vmatmul.bf16.gmra.mxu0 %v452
      %v463 = vpop.f32.mrf.mxu0
      %v464 = vadd.f32 0.0, %v463
      %v465 = vpop.f32.mrf.mxu0
      %466 = vdwg.mxu0
      %v467 = vadd.f32 %v432, %v464
      %v468 = vxor.u32 %v467, 2147483648
      %v469 = vmul.f32 %v468, 1.442695
      %v470 = vpow.pop %v469
      %v471 = vadd.f32 %v470, 1.0
      %v472 = vrcp.pop %v471
      %v473 = vmul.f32 %v471, %v472
      %v474 = vsub.f32 1.0, %v473
      %v475 = vmul.f32 %v472, %v474
      %v476 = vadd.f32 %v472, %v475
      %vm477 = vweird.f32 %v471
      %vm478 = vweird.f32 %v472
      %vm479 = vmor %vm477, %vm478
      %v480 = vsel %vm479, %v472, %v476
      %v481 = vand.u32 2147483647, %v471
      %vm482 = vcmp.eq.f32.partialorder %v481, 8.507059e+37
      %v483 = vand.u32 %v471, 2147483648
      %v484 = vor.u32 1.1754944e-38, %v483
      %v485 = vsel %vm482, %v484, %v480
      %v486 = vmul.f32 1.0, %v485
      %v487 = vtanh.pop %v467
      %489 = vrot.lane.b32.xlu0 %v430, 32
      %v490 = vpop.permute.xlu0 %489
      %v492 = vmul.f32 %v486, %v490
      %494 = vrot.lane.b32.xlu0 %v487, 64
      %v495 = vpop.permute.xlu0 %494
      %v497 = vmul.f32 %v486, %v495
      %499 = vrot.lane.b32.xlu0 %v497, 32
      %v500 = vpop.permute.xlu0 %499
      %v502 = vadd.f32 %v492, %v500
      %v503 = vtanh.pop %v502
      %505 = vrot.lane.b32.xlu0 %v503, 64
      %v506 = vpop.permute.xlu0 %505
      %v508 = vmul.f32 %v486, %v506
      %v509 = vpack.c.bf16 %v508, %v508
      %511 = vrot.lane.b32.xlu0 %v509, 32
      %v512 = vpop.permute.xlu0 %511
      %vm514 = vcmask 257024
      %515 = vst.msk [vmem:[#allocation4] sm:$0xf] %vm514, %v512
      %s516 = scalar_lea.vmem [#allocation5], 4
      %v517 = vld [vmem:[%s516] sm:$0xf]
      %v518 = vunpack.c.l.bf16 %v517
      %v519 = vld [vmem:[%s3] sm:$0xf]
      %v520 = vld [vmem:[%s3 + $0x4] sm:$0xf]
      %v521 = vld [vmem:[%s3 + $0x8] sm:$0xf]
      %v522 = vld [vmem:[%s3 + $0xc] sm:$0xf]
      %v523 = vunpack.c.l.b16 %v509
      %v524 = vpack.c.b16 %v523, %v523
      %525 = vrot.lane.b32.xlu0 %v524, 32
      %v526 = vpop.permute.xlu0 %525
      %v531 = vunpack.c.l.b16 %v519
      %v532 = vunpack.c.l.b16 %v520
      %v533 = vunpack.c.l.b16 %v521
      %v534 = vunpack.c.l.b16 %v522
      %v535 = vpack.c.b16 %v532, %v531
      %v536 = vpack.c.b16 %v534, %v533
      %v540 = vsel %vm450, %v526, 0
      %542 = vmatpush.bf16.msra.mxu0 0
      %543 = vmatpush.bf16.msra.mxu0 0
      %544 = vmatpush.bf16.msra.mxu0 0
      %545 = vmatpush.bf16.msra.mxu0 0
      %546 = vmatpush.bf16.msra.mxu0 0
      %547 = vmatpush.bf16.msra.mxu0 0
      %548 = vmatpush.bf16.msra.mxu0 %v536
      %549 = vmatpush.bf16.msra.mxu0 %v535
      %550 = vmatmul.bf16.gmra.mxu0 %v540
      %v551 = vpop.f32.mrf.mxu0
      %v552 = vadd.f32 0.0, %v551
      %v553 = vpop.f32.mrf.mxu0
      %554 = vdwg.mxu0
      %v555 = vadd.f32 %v518, %v552
      %v556 = vxor.u32 %v555, 2147483648
      %v557 = vmul.f32 %v556, 1.442695
      %v558 = vpow.pop %v557
      %v559 = vadd.f32 %v558, 1.0
      %v560 = vrcp.pop %v559
      %v561 = vmul.f32 %v559, %v560
      %v562 = vsub.f32 1.0, %v561
      %v563 = vmul.f32 %v560, %v562
      %v564 = vadd.f32 %v560, %v563
      %vm565 = vweird.f32 %v559
      %vm566 = vweird.f32 %v560
      %vm567 = vmor %vm565, %vm566
      %v568 = vsel %vm567, %v560, %v564
      %v569 = vand.u32 2147483647, %v559
      %vm570 = vcmp.eq.f32.partialorder %v569, 8.507059e+37
      %v571 = vand.u32 %v559, 2147483648
      %v572 = vor.u32 1.1754944e-38, %v571
      %v573 = vsel %vm570, %v572, %v568
      %v574 = vmul.f32 1.0, %v573
      %v575 = vtanh.pop %v555
      %v576 = vmul.f32 %v574, %v502
      %578 = vrot.lane.b32.xlu0 %v575, 64
      %v579 = vpop.permute.xlu0 %578
      %v581 = vmul.f32 %v574, %v579
      %583 = vrot.lane.b32.xlu0 %v581, 32
      %v584 = vpop.permute.xlu0 %583
      %v586 = vadd.f32 %v576, %v584
      %v587 = vtanh.pop %v586
      %589 = vrot.lane.b32.xlu0 %v587, 64
      %v590 = vpop.permute.xlu0 %589
      %v592 = vmul.f32 %v574, %v590
      %v593 = vpack.c.bf16 %v592, %v592
      %595 = vrot.lane.b32.xlu0 %v593, 32
      %v596 = vpop.permute.xlu0 %595
      %s598 = scalar_lea.vmem [#allocation4], 4
      %599 = vst.msk [vmem:[%s598] sm:$0xf] %vm514, %v596
      %s600 = scalar_lea.vmem [#allocation5], 8
      %v601 = vld [vmem:[%s600] sm:$0xf]
      %v602 = vunpack.c.l.bf16 %v601
      %v603 = vld [vmem:[%s3] sm:$0xf]
      %v604 = vld [vmem:[%s3 + $0x4] sm:$0xf]
      %v605 = vld [vmem:[%s3 + $0x8] sm:$0xf]
      %v606 = vld [vmem:[%s3 + $0xc] sm:$0xf]
      %v607 = vunpack.c.l.b16 %v593
      %v608 = vpack.c.b16 %v607, %v607
      %609 = vrot.lane.b32.xlu0 %v608, 32
      %v610 = vpop.permute.xlu0 %609
      %v615 = vunpack.c.l.b16 %v603
      %v616 = vunpack.c.l.b16 %v604
      %v617 = vunpack.c.l.b16 %v605
      %v618 = vunpack.c.l.b16 %v606
      %v619 = vpack.c.b16 %v616, %v615
      %v620 = vpack.c.b16 %v618, %v617
      %v624 = vsel %vm450, %v610, 0
      %626 = vmatpush.bf16.msra.mxu0 0
      %627 = vmatpush.bf16.msra.mxu0 0
      %628 = vmatpush.bf16.msra.mxu0 0
      %629 = vmatpush.bf16.msra.mxu0 0
      %630 = vmatpush.bf16.msra.mxu0 0
      %631 = vmatpush.bf16.msra.mxu0 0
      %632 = vmatpush.bf16.msra.mxu0 %v620
      %633 = vmatpush.bf16.msra.mxu0 %v619
      %634 = vmatmul.bf16.gmra.mxu0 %v624
      %v635 = vpop.f32.mrf.mxu0
      %v636 = vadd.f32 0.0, %v635
      %v637 = vpop.f32.mrf.mxu0
      %638 = vdwg.mxu0
      %v639 = vadd.f32 %v602, %v636
      %v640 = vxor.u32 %v639, 2147483648
      %v641 = vmul.f32 %v640, 1.442695
      %v642 = vpow.pop %v641
      %v643 = vadd.f32 %v642, 1.0
      %v644 = vrcp.pop %v643
      %v645 = vmul.f32 %v643, %v644
      %v646 = vsub.f32 1.0, %v645
      %v647 = vmul.f32 %v644, %v646
      %v648 = vadd.f32 %v644, %v647
      %vm649 = vweird.f32 %v643
      %vm650 = vweird.f32 %v644
      %vm651 = vmor %vm649, %vm650
      %v652 = vsel %vm651, %v644, %v648
      %v653 = vand.u32 2147483647, %v643
      %vm654 = vcmp.eq.f32.partialorder %v653, 8.507059e+37
      %v655 = vand.u32 %v643, 2147483648
      %v656 = vor.u32 1.1754944e-38, %v655
      %v657 = vsel %vm654, %v656, %v652
      %v658 = vmul.f32 1.0, %v657
      %v659 = vtanh.pop %v639
      %v660 = vmul.f32 %v658, %v586
      %662 = vrot.lane.b32.xlu0 %v659, 64
      %v663 = vpop.permute.xlu0 %662
      %v665 = vmul.f32 %v658, %v663
      %667 = vrot.lane.b32.xlu0 %v665, 32
      %v668 = vpop.permute.xlu0 %667
      %v670 = vadd.f32 %v660, %v668
      %v671 = vtanh.pop %v670
      %673 = vrot.lane.b32.xlu0 %v671, 64
      %v674 = vpop.permute.xlu0 %673
      %v676 = vmul.f32 %v658, %v674
      %v677 = vpack.c.bf16 %v676, %v676
      %679 = vrot.lane.b32.xlu0 %v677, 32
      %v680 = vpop.permute.xlu0 %679
      %s682 = scalar_lea.vmem [#allocation4], 8
      %683 = vst.msk [vmem:[%s682] sm:$0xf] %vm514, %v680
      %s684 = scalar_lea.vmem [#allocation5], 12
      %v685 = vld [vmem:[%s684] sm:$0xf]
      %v686 = vunpack.c.l.bf16 %v685
      %v687 = vld [vmem:[%s3] sm:$0xf]
      %v688 = vld [vmem:[%s3 + $0x4] sm:$0xf]
      %v689 = vld [vmem:[%s3 + $0x8] sm:$0xf]
      %v690 = vld [vmem:[%s3 + $0xc] sm:$0xf]
      %v691 = vunpack.c.l.b16 %v677
      %v692 = vpack.c.b16 %v691, %v691
      %693 = vrot.lane.b32.xlu0 %v692, 32
      %v694 = vpop.permute.xlu0 %693
      %v699 = vunpack.c.l.b16 %v687
      %v700 = vunpack.c.l.b16 %v688
      %v701 = vunpack.c.l.b16 %v689
      %v702 = vunpack.c.l.b16 %v690
      %v703 = vpack.c.b16 %v700, %v699
      %v704 = vpack.c.b16 %v702, %v701
      %v708 = vsel %vm450, %v694, 0
      %710 = vmatpush.bf16.msra.mxu0 0
      %711 = vmatpush.bf16.msra.mxu0 0
      %712 = vmatpush.bf16.msra.mxu0 0
      %713 = vmatpush.bf16.msra.mxu0 0
      %714 = vmatpush.bf16.msra.mxu0 0
      %715 = vmatpush.bf16.msra.mxu0 0
      %716 = vmatpush.bf16.msra.mxu0 %v704
      %717 = vmatpush.bf16.msra.mxu0 %v703
      %718 = vmatmul.bf16.gmra.mxu0 %v708
      %v719 = vpop.f32.mrf.mxu0
      %v720 = vadd.f32 0.0, %v719
      %v721 = vpop.f32.mrf.mxu0
      %722 = vdwg.mxu0
      %v723 = vadd.f32 %v686, %v720
      %v724 = vxor.u32 %v723, 2147483648
      %v725 = vmul.f32 %v724, 1.442695
      %v726 = vpow.pop %v725
      %v727 = vadd.f32 %v726, 1.0
      %v728 = vrcp.pop %v727
      %v729 = vmul.f32 %v727, %v728
      %v730 = vsub.f32 1.0, %v729
      %v731 = vmul.f32 %v728, %v730
      %v732 = vadd.f32 %v728, %v731
      %vm733 = vweird.f32 %v727
      %vm734 = vweird.f32 %v728
      %vm735 = vmor %vm733, %vm734
      %v736 = vsel %vm735, %v728, %v732
      %v737 = vand.u32 2147483647, %v727
      %vm738 = vcmp.eq.f32.partialorder %v737, 8.507059e+37
      %v739 = vand.u32 %v727, 2147483648
      %v740 = vor.u32 1.1754944e-38, %v739
      %v741 = vsel %vm738, %v740, %v736
      %v742 = vmul.f32 1.0, %v741
      %v743 = vtanh.pop %v723
      %v744 = vmul.f32 %v742, %v670
      %746 = vrot.lane.b32.xlu0 %v743, 64
      %v747 = vpop.permute.xlu0 %746
      %v749 = vmul.f32 %v742, %v747
      %751 = vrot.lane.b32.xlu0 %v749, 32
      %v752 = vpop.permute.xlu0 %751
      %v754 = vadd.f32 %v744, %v752
      %v755 = vtanh.pop %v754
      %757 = vrot.lane.b32.xlu0 %v755, 64
      %v758 = vpop.permute.xlu0 %757
      %v760 = vmul.f32 %v742, %v758
      %v761 = vpack.c.bf16 %v760, %v760
      %763 = vrot.lane.b32.xlu0 %v761, 32
      %v764 = vpop.permute.xlu0 %763
      %s766 = scalar_lea.vmem [#allocation4], 12
      %767 = vst.msk [vmem:[%s766] sm:$0xf] %vm514, %v764
      %769 = vrot.lane.b32.xlu0 %v760, 32
      %v770 = vpop.permute.xlu0 %769
      %772 = vst.msk [vmem:[#allocation2] sm:$0xff] %vm450, %v770
      %774 = vrot.lane.b32.xlu0 %v754, 96
      %v775 = vpop.permute.xlu0 %774
      %777 = vst.msk [vmem:[#allocation3] sm:$0xff] %vm450, %v775
      %v778 = vld [vmem:[#allocation4] sm:$0xf]
      %v779 = vld [vmem:[#allocation4 + $0x4] sm:$0xf]
      %v780 = vld [vmem:[#allocation4 + $0x8] sm:$0xf]
      %v781 = vld [vmem:[#allocation4 + $0xc] sm:$0xf]
      %v782 = vld [vmem:[%s2] sm:$0xf]
      %v783 = vld [vmem:[%s2 + $0x4] sm:$0xf]
      %v784 = vld [vmem:[%s2 + $0x8] sm:$0xf]
      %v785 = vld [vmem:[%s2 + $0xc] sm:$0xf]
      %v786 = vld [vmem:[%s6] sm:$0x1]
      %v788 = vperm.slane %v786, 0
      %v794 = vunpack.c.l.b16 %v778
      %v795 = vunpack.c.l.b16 %v779
      %v796 = vunpack.c.l.b16 %v780
      %v797 = vunpack.c.l.b16 %v781
      %v798 = vpack.c.b16 %v795, %v794
      %v799 = vpack.c.b16 %v797, %v796
      %v804 = vunpack.c.l.b16 %v782
      %v805 = vunpack.c.l.b16 %v783
      %v806 = vunpack.c.l.b16 %v784
      %v807 = vunpack.c.l.b16 %v785
      %v808 = vpack.c.b16 %v805, %v804
      %v809 = vpack.c.b16 %v807, %v806
      %v813 = vsel %vm450, %v798, 0
      %v816 = vsel %vm450, %v799, 0
      %818 = vmatpush.bf16.msra.mxu0 0
      %819 = vmatpush.bf16.msra.mxu0 0
      %820 = vmatpush.bf16.msra.mxu0 0
      %821 = vmatpush.bf16.msra.mxu0 0
      %822 = vmatpush.bf16.msra.mxu0 0
      %823 = vmatpush.bf16.msra.mxu0 0
      %824 = vmatpush.bf16.msra.mxu0 %v809
      %825 = vmatpush.bf16.msra.mxu0 %v808
      %826 = vmatmul.bf16.gmra.mxu0 %v813
      %v827 = vpop.f32.mrf.mxu0
      %v828 = vadd.f32 %v788, %v827
      %v829 = vpop.f32.mrf.mxu0
      %v830 = vadd.f32 %v788, %v829
      %831 = vmatmul.bf16.gmra.mxu0 %v816
      %v832 = vpop.f32.mrf.mxu0
      %v833 = vadd.f32 %v788, %v832
      %v834 = vpop.f32.mrf.mxu0
      %v835 = vadd.f32 %v788, %v834
      %836 = vdwg.mxu0
      %v837 = vpack.c.bf16 %v828, %v828
      %v838 = vpack.c.bf16 %v830, %v830
      %v839 = vpack.c.bf16 %v833, %v833
      %v840 = vpack.c.bf16 %v835, %v835
      %841 = vst [vmem:[#allocation5] sm:$0xf] %v837
      %842 = vst [vmem:[#allocation5 + $0x4] sm:$0xf] %v838
      %843 = vst [vmem:[#allocation5 + $0x8] sm:$0xf] %v839
      %844 = vst [vmem:[#allocation5 + $0xc] sm:$0xf] %v840
      %s845 = scalar_lea.vmem [#allocation2], 8
      %v846 = vld [vmem:[%s845] sm:$0xff]
      %s847 = scalar_lea.vmem [#allocation3], 8
      %v848 = vld [vmem:[%s847] sm:$0xff]
      %v849 = vld [vmem:[#allocation5] sm:$0xf]
      %v850 = vunpack.c.l.bf16 %v849
      %v851 = vpack.c.bf16 %v846, %v846
      %v852 = vld [vmem:[%s4] sm:$0xf]
      %v853 = vld [vmem:[%s4 + $0x4] sm:$0xf]
      %v854 = vld [vmem:[%s4 + $0x8] sm:$0xf]
      %v855 = vld [vmem:[%s4 + $0xc] sm:$0xf]
      %v860 = vunpack.c.l.b16 %v852
      %v861 = vunpack.c.l.b16 %v853
      %v862 = vunpack.c.l.b16 %v854
      %v863 = vunpack.c.l.b16 %v855
      %v864 = vpack.c.b16 %v861, %v860
      %v865 = vpack.c.b16 %v863, %v862
      %v869 = vsel %vm450, %v851, 0
      %871 = vmatpush.bf16.msra.mxu0 0
      %872 = vmatpush.bf16.msra.mxu0 0
      %873 = vmatpush.bf16.msra.mxu0 0
      %874 = vmatpush.bf16.msra.mxu0 0
      %875 = vmatpush.bf16.msra.mxu0 0
      %876 = vmatpush.bf16.msra.mxu0 0
      %877 = vmatpush.bf16.msra.mxu0 %v865
      %878 = vmatpush.bf16.msra.mxu0 %v864
      %879 = vmatmul.bf16.gmra.mxu0 %v869
      %v880 = vpop.f32.mrf.mxu0
      %v881 = vadd.f32 0.0, %v880
      %v882 = vpop.f32.mrf.mxu0
      %883 = vdwg.mxu0
      %v884 = vadd.f32 %v850, %v881
      %v885 = vxor.u32 %v884, 2147483648
      %v886 = vmul.f32 %v885, 1.442695
      %v887 = vpow.pop %v886
      %v888 = vadd.f32 %v887, 1.0
      %v889 = vrcp.pop %v888
      %v890 = vmul.f32 %v888, %v889
      %v891 = vsub.f32 1.0, %v890
      %v892 = vmul.f32 %v889, %v891
      %v893 = vadd.f32 %v889, %v892
      %vm894 = vweird.f32 %v888
      %vm895 = vweird.f32 %v889
      %vm896 = vmor %vm894, %vm895
      %v897 = vsel %vm896, %v889, %v893
      %v898 = vand.u32 2147483647, %v888
      %vm899 = vcmp.eq.f32.partialorder %v898, 8.507059e+37
      %v900 = vand.u32 %v888, 2147483648
      %v901 = vor.u32 1.1754944e-38, %v900
      %v902 = vsel %vm899, %v901, %v897
      %v903 = vmul.f32 1.0, %v902
      %v904 = vtanh.pop %v884
      %906 = vrot.lane.b32.xlu0 %v848, 32
      %v907 = vpop.permute.xlu0 %906
      %v909 = vmul.f32 %v903, %v907
      %911 = vrot.lane.b32.xlu0 %v904, 64
      %v912 = vpop.permute.xlu0 %911
      %v914 = vmul.f32 %v903, %v912
      %916 = vrot.lane.b32.xlu0 %v914, 32
      %v917 = vpop.permute.xlu0 %916
      %v919 = vadd.f32 %v909, %v917
      %v920 = vtanh.pop %v919
      %922 = vrot.lane.b32.xlu0 %v920, 64
      %v923 = vpop.permute.xlu0 %922
      %v925 = vmul.f32 %v903, %v923
      %v926 = vld [vmem:[%s516] sm:$0xf]
      %v927 = vunpack.c.l.bf16 %v926
      %v928 = vpack.c.bf16 %v925, %v925
      %930 = vrot.lane.b32.xlu0 %v928, 32
      %v931 = vpop.permute.xlu0 %930
      %v933 = vsel %vm450, %v931, 0
      %935 = vmatpush.bf16.msra.mxu0 0
      %936 = vmatpush.bf16.msra.mxu0 0
      %937 = vmatpush.bf16.msra.mxu0 0
      %938 = vmatpush.bf16.msra.mxu0 0
      %939 = vmatpush.bf16.msra.mxu0 0
      %940 = vmatpush.bf16.msra.mxu0 0
      %941 = vmatpush.bf16.msra.mxu0 %v865
      %942 = vmatpush.bf16.msra.mxu0 %v864
      %943 = vmatmul.bf16.gmra.mxu0 %v933
      %v944 = vpop.f32.mrf.mxu0
      %v945 = vadd.f32 0.0, %v944
      %v946 = vpop.f32.mrf.mxu0
      %947 = vdwg.mxu0
      %v948 = vadd.f32 %v927, %v945
      %v949 = vxor.u32 %v948, 2147483648
      %v950 = vmul.f32 %v949, 1.442695
      %v951 = vpow.pop %v950
      %v952 = vadd.f32 %v951, 1.0
      %v953 = vrcp.pop %v952
      %v954 = vmul.f32 %v952, %v953
      %v955 = vsub.f32 1.0, %v954
      %v956 = vmul.f32 %v953, %v955
      %v957 = vadd.f32 %v953, %v956
      %vm958 = vweird.f32 %v952
      %vm959 = vweird.f32 %v953
      %vm960 = vmor %vm958, %vm959
      %v961 = vsel %vm960, %v953, %v957
      %v962 = vand.u32 2147483647, %v952
      %vm963 = vcmp.eq.f32.partialorder %v962, 8.507059e+37
      %v964 = vand.u32 %v952, 2147483648
      %v965 = vor.u32 1.1754944e-38, %v964
      %v966 = vsel %vm963, %v965, %v961
      %v967 = vmul.f32 1.0, %v966
      %v968 = vtanh.pop %v948
      %v969 = vmul.f32 %v967, %v919
      %971 = vrot.lane.b32.xlu0 %v968, 64
      %v972 = vpop.permute.xlu0 %971
      %v974 = vmul.f32 %v967, %v972
      %976 = vrot.lane.b32.xlu0 %v974, 32
      %v977 = vpop.permute.xlu0 %976
      %v979 = vadd.f32 %v969, %v977
      %v980 = vtanh.pop %v979
      %982 = vrot.lane.b32.xlu0 %v980, 64
      %v983 = vpop.permute.xlu0 %982
      %v985 = vmul.f32 %v967, %v983
      %v986 = vld [vmem:[%s600] sm:$0xf]
      %v987 = vunpack.c.l.bf16 %v986
      %v988 = vpack.c.bf16 %v985, %v985
      %990 = vrot.lane.b32.xlu0 %v988, 32
      %v991 = vpop.permute.xlu0 %990
      %v993 = vsel %vm450, %v991, 0
      %995 = vmatpush.bf16.msra.mxu0 0
      %996 = vmatpush.bf16.msra.mxu0 0
      %997 = vmatpush.bf16.msra.mxu0 0
      %998 = vmatpush.bf16.msra.mxu0 0
      %999 = vmatpush.bf16.msra.mxu0 0
      %1000 = vmatpush.bf16.msra.mxu0 0
      %1001 = vmatpush.bf16.msra.mxu0 %v865
      %1002 = vmatpush.bf16.msra.mxu0 %v864
      %1003 = vmatmul.bf16.gmra.mxu0 %v993
      %v1004 = vpop.f32.mrf.mxu0
      %v1005 = vadd.f32 0.0, %v1004
      %v1006 = vpop.f32.mrf.mxu0
      %1007 = vdwg.mxu0
      %v1008 = vadd.f32 %v987, %v1005
      %v1009 = vxor.u32 %v1008, 2147483648
      %v1010 = vmul.f32 %v1009, 1.442695
      %v1011 = vpow.pop %v1010
      %v1012 = vadd.f32 %v1011, 1.0
      %v1013 = vrcp.pop %v1012
      %v1014 = vmul.f32 %v1012, %v1013
      %v1015 = vsub.f32 1.0, %v1014
      %v1016 = vmul.f32 %v1013, %v1015
      %v1017 = vadd.f32 %v1013, %v1016
      %vm1018 = vweird.f32 %v1012
      %vm1019 = vweird.f32 %v1013
      %vm1020 = vmor %vm1018, %vm1019
      %v1021 = vsel %vm1020, %v1013, %v1017
      %v1022 = vand.u32 2147483647, %v1012
      %vm1023 = vcmp.eq.f32.partialorder %v1022, 8.507059e+37
      %v1024 = vand.u32 %v1012, 2147483648
      %v1025 = vor.u32 1.1754944e-38, %v1024
      %v1026 = vsel %vm1023, %v1025, %v1021
      %v1027 = vmul.f32 1.0, %v1026
      %v1028 = vtanh.pop %v1008
      %v1029 = vmul.f32 %v1027, %v979
      %1031 = vrot.lane.b32.xlu0 %v1028, 64
      %v1032 = vpop.permute.xlu0 %1031
      %v1034 = vmul.f32 %v1027, %v1032
      %1036 = vrot.lane.b32.xlu0 %v1034, 32
      %v1037 = vpop.permute.xlu0 %1036
      %v1039 = vadd.f32 %v1029, %v1037
      %v1040 = vtanh.pop %v1039
      %1042 = vrot.lane.b32.xlu0 %v1040, 64
      %v1043 = vpop.permute.xlu0 %1042
      %v1045 = vmul.f32 %v1027, %v1043
      %v1046 = vld [vmem:[%s684] sm:$0xf]
      %v1047 = vunpack.c.l.bf16 %v1046
      %v1048 = vpack.c.bf16 %v1045, %v1045
      %1050 = vrot.lane.b32.xlu0 %v1048, 32
      %v1051 = vpop.permute.xlu0 %1050
      %v1053 = vsel %vm450, %v1051, 0
      %1055 = vmatpush.bf16.msra.mxu0 0
      %1056 = vmatpush.bf16.msra.mxu0 0
      %1057 = vmatpush.bf16.msra.mxu0 0
      %1058 = vmatpush.bf16.msra.mxu0 0
      %1059 = vmatpush.bf16.msra.mxu0 0
      %1060 = vmatpush.bf16.msra.mxu0 0
      %1061 = vmatpush.bf16.msra.mxu0 %v865
      %1062 = vmatpush.bf16.msra.mxu0 %v864
      %1063 = vmatmul.bf16.gmra.mxu0 %v1053
      %v1064 = vpop.f32.mrf.mxu0
      %v1065 = vadd.f32 0.0, %v1064
      %v1066 = vpop.f32.mrf.mxu0
      %1067 = vdwg.mxu0
      %v1068 = vadd.f32 %v1047, %v1065
      %v1069 = vxor.u32 %v1068, 2147483648
      %v1070 = vmul.f32 %v1069, 1.442695
      %v1071 = vpow.pop %v1070
      %v1072 = vadd.f32 %v1071, 1.0
      %v1073 = vrcp.pop %v1072
      %v1074 = vmul.f32 %v1072, %v1073
      %v1075 = vsub.f32 1.0, %v1074
      %v1076 = vmul.f32 %v1073, %v1075
      %v1077 = vadd.f32 %v1073, %v1076
      %vm1078 = vweird.f32 %v1072
      %vm1079 = vweird.f32 %v1073
      %vm1080 = vmor %vm1078, %vm1079
      %v1081 = vsel %vm1080, %v1073, %v1077
      %v1082 = vand.u32 2147483647, %v1072
      %vm1083 = vcmp.eq.f32.partialorder %v1082, 8.507059e+37
      %v1084 = vand.u32 %v1072, 2147483648
      %v1085 = vor.u32 1.1754944e-38, %v1084
      %v1086 = vsel %vm1083, %v1085, %v1081
      %v1087 = vmul.f32 1.0, %v1086
      %v1088 = vtanh.pop %v1068
      %v1089 = vmul.f32 %v1087, %v1039
      %1091 = vrot.lane.b32.xlu0 %v1088, 64
      %v1092 = vpop.permute.xlu0 %1091
      %v1094 = vmul.f32 %v1087, %v1092
      %1096 = vrot.lane.b32.xlu0 %v1094, 32
      %v1097 = vpop.permute.xlu0 %1096
      %v1099 = vadd.f32 %v1089, %v1097
      %v1100 = vtanh.pop %v1099
      %1102 = vrot.lane.b32.xlu0 %v1100, 64
      %v1103 = vpop.permute.xlu0 %1102
      %v1105 = vmul.f32 %v1087, %v1103
      %1107 = vrot.lane.b32.xlu0 %v1105, 32
      %v1108 = vpop.permute.xlu0 %1107
      %1110 = vst.msk [vmem:[%s845] sm:$0xff] %vm450, %v1108
      %1112 = vrot.lane.b32.xlu0 %v1099, 96
      %v1113 = vpop.permute.xlu0 %1112
      %1115 = vst.msk [vmem:[%s847] sm:$0xff] %vm450, %v1113
      %p1116 = scmp.eq.s32.totalorder %s25, 1
      // Predicated region
      $region61: #{_lambda_.1} parent=55 // pred_check
        %p1117 = pneg %p1116
      $region62: #{_lambda_.1} parent=55 // pred_check_branch
        %1119 = sbr.rel (%p1117) target = $region64
      $region63: #{_lambda_.1} parent=55 // pred_region
        %v1120 = vld [vmem:[%s845] sm:$0xff]
        %v1121 = vpack.c.bf16 %v1120, %v1120
        %v1122 = vld [vmem:[%s7] sm:$0xf]
        %v1123 = vld [vmem:[%s7 + $0x4] sm:$0xf]
        %v1124 = vld [vmem:[%s7 + $0x8] sm:$0xf]
        %v1125 = vld [vmem:[%s7 + $0xc] sm:$0xf]
        %v1126 = vld [vmem:[%s8] sm:$0x1]
        %v1128 = vperm.slane %v1126, 0
        %v1134 = vunpack.c.l.b16 %v1122
        %v1135 = vunpack.c.l.b16 %v1123
        %v1136 = vunpack.c.l.b16 %v1124
        %v1137 = vunpack.c.l.b16 %v1125
        %v1138 = vpack.c.b16 %v1135, %v1134
        %v1139 = vpack.c.b16 %v1137, %v1136
        %v1143 = vsel %vm450, %v1121, 0
        %1145 = vmatpush.bf16.msra.mxu0 0
        %1146 = vmatpush.bf16.msra.mxu0 0
        %1147 = vmatpush.bf16.msra.mxu0 0
        %1148 = vmatpush.bf16.msra.mxu0 0
        %1149 = vmatpush.bf16.msra.mxu0 0
        %1150 = vmatpush.bf16.msra.mxu0 0
        %1151 = vmatpush.bf16.msra.mxu0 %v1139
        %1152 = vmatpush.bf16.msra.mxu0 %v1138
        %1153 = vmatmul.bf16.gmra.mxu0 %v1143
        %v1154 = vpop.f32.mrf.mxu0
        %v1155 = vadd.f32 %v1128, %v1154
        %v1156 = vpop.f32.mrf.mxu0
        %1157 = vdwg.mxu0
        %1158 = vst [vmem:[%s358] sm:$0xff] %v1155
      $region64: #{_lambda_.1} parent=55 // pred_fallthru
        _
      %p1159 = scmp.lt.s32.totalorder %s24, 0
      %s1160 = scalar_select %p1159, %s24, 0
      %s1161 = smul.addr %s1160, 8
      %s1162 = scalar_lea.vmem %s9, %s1161
      // Predicated region
      $region65: #{_lambda_.1} parent=55 // pred_check
        %p1163 = pneg %p248
      $region66: #{_lambda_.1} parent=55 // pred_check_branch
        %1165 = sbr.rel (%p1163) target = $region68
      $region67: #{_lambda_.1} parent=55 // pred_region
        _
      $region68: #{_lambda_.1} parent=55 // pred_fallthru
        _
      // Predicated region
      $region69: #{_lambda_.1} parent=55 // pred_check
        %p1166 = pneg %p248
      $region70: #{_lambda_.1} parent=55 // pred_check_branch
        %1168 = sbr.rel (%p1166) target = $region72
      $region71: #{_lambda_.1} parent=55 // pred_region
        %p1169 = scmp.lt.s32.totalorder %s24, 0
        %s1170 = scalar_select %p1169, %s24, 0
        %s1171 = smul.addr %s1170, 8
        %s1172 = scalar_lea.vmem %s9, %s1171
      $region72: #{_lambda_.1} parent=55 // pred_fallthru
        _
    $region56: #{_lambda_.1} parent=5 // pred_fallthru
      _
    %p1173 = scmp.le.s32.totalorder 2, %s15
    // Predicated region
    $region73: #{_lambda_.1} parent=5 // pred_check
      %p1174 = pneg %p1173
    $region74: #{_lambda_.1} parent=5 // pred_check_branch
      %1176 = sbr.rel (%p1174) target = $region76
    $region75: #{_lambda_.1} parent=5 // pred_region
      %s1177 = ssub.s32 %s15, 2
    $region76: #{_lambda_.1} parent=5 // pred_fallthru
      _
  $region6: #{_lambda_.1} parent=0 // loop_footer
    %s19 = sadd.s32 1, %s15
  $region7: #{_lambda_.1} parent=0 // loop_footer_branch
    %14 = sbr.rel target = $region3
  $region8: #{_lambda_.1} parent=0 // loop_exit
    _

</llo_original>
